<compile_context>
chip_gen: v5e
topology: v5e:2x2
jax: 0.10.0
libtpu: 0.0.40
codegen_flags: <defaults>
</compile_context>

<pallas_src>
import functools

import jax
import jax.numpy as jnp
import numpy as np
from jax.experimental import pallas as pl
from jax.experimental.pallas import tpu as pltpu

LANE = 128


def _rup(x, m=LANE):
    return ((x + m - 1) // m) * m


def _pad2(a, r, c):
    return jnp.pad(a, ((0, r - a.shape[0]), (0, c - a.shape[1])))


def _pad1(a, c):
    return jnp.pad(a, (0, c - a.shape[0]))


# --------------------------------------------------------------------------
# In-kernel helpers (operate on VMEM/vreg values, no HBM traffic)
# --------------------------------------------------------------------------
def _row_shift(x, s):
    """y[a] = x[a + s], zero-padded outside [0, L).  `s` is a small static
    int; the common case s == 0 is a no-op, so the sublane slice+concat only
    fires for the single wrap-around block of a phase."""
    if s == 0:
        return x
    L, C = x.shape
    if abs(s) >= L:
        return jnp.zeros_like(x)
    z = jnp.zeros((abs(s), C), x.dtype)
    if s > 0:
        return jnp.concatenate([jax.lax.slice_in_dim(x, s, L, axis=0), z], axis=0)
    return jnp.concatenate([z, jax.lax.slice_in_dim(x, 0, L + s, axis=0)], axis=0)


# --------------------------------------------------------------------------
# Fully fused decoder kernel.  grid = (tower, batch); tower 0 = count head
# (p, n), tower 1 = gaussian head (mu, var).  Tower selection happens purely
# through the weight BlockSpec index_maps.
# --------------------------------------------------------------------------
def _decoder_kernel(*refs, n_layers, S, phase_ds, f2_real, f1_pad):
    it = iter(refs)
    src_ref = next(it)          # (1, L2, F2p)        f32
    ymd_ref = next(it)          # (1, 1, F1p)         f32
    w_emb_ref = next(it)        # (F1p, MDp)          bf16
    b_emb_ref = next(it)        # (1, MDp)            f32
    w_src_ref = next(it)        # (F2p, F2p)          bf16
    w_md_ref = next(it)         # (MDp, F2p)          bf16
    b_fus_ref = next(it)        # (1, F2p)            f32
    gamma_ref = next(it)        # (1, F2p)            f32
    beta_ref = next(it)         # (1, F2p)            f32
    layer_refs = []
    for _ in range(n_layers):
        wps = [next(it) for _ in range(S)]   # each (1, K_p, Coutp)   bf16
        bias_ref = next(it)                  # (1, 1, Coutp)          f32
        layer_refs.append((wps, bias_ref))
    w_head_ref = next(it)       # (1, F1p, 2*F1p)     bf16
    b_head_ref = next(it)       # (1, 1, 2*F1p)       f32
    out_ref = next(it)          # (1, 1, L1, 2*F1p)   f32

    tower = pl.program_id(0)

    # ---- metadata embedding + fusion Linear + LayerNorm (this batch row) ----
    # concat([src, emb]) @ W  ==  src @ W_src + emb @ W_md   (no concat/expand)
    ymd = ymd_ref[0].astype(jnp.bfloat16)                                # (1, F1p)
    emb = jnp.dot(ymd, w_emb_ref[...],
                  preferred_element_type=jnp.float32) + b_emb_ref[...]   # (1, MDp)
    hmd = jnp.dot(emb.astype(jnp.bfloat16), w_md_ref[...],
                  preferred_element_type=jnp.float32)                    # (1, F2p)
    h = jnp.dot(src_ref[0].astype(jnp.bfloat16), w_src_ref[...],
                preferred_element_type=jnp.float32)
    h = h + hmd + b_fus_ref[...]                                         # (L2, F2p)
    # LayerNorm over the real F2 channels (padded lanes of h are exactly 0).
    inv_f2 = 1.0 / f2_real
    mean = jnp.sum(h, axis=-1, keepdims=True) * inv_f2
    var = jnp.sum(h * h, axis=-1, keepdims=True) * inv_f2 - mean * mean
    h = (h - mean) * jax.lax.rsqrt(var + 1e-5) * gamma_ref[...] + beta_ref[...]

    # ---- deconv tower (phase-blocked, entirely in VMEM/vregs) ---------------
    # Block q row a of the current activation == logical position a*nq + q.
    L0 = h.shape[0]
    blocks = [h.astype(jnp.bfloat16)]
    for wps, bias_ref in layer_refs:
        nq = len(blocks)
        bias = bias_ref[0]                                               # (1, Coutp)
        new_blocks = [None] * (nq * S)
        for p in range(S):
            parts = []
            for d in phase_ds[p]:
                cols = []
                for q in range(nq):
                    qp = (q - d) % nq
                    s = (q - d - qp) // nq
                    cols.append(_row_shift(blocks[qp], s))
                parts.append(cols[0] if nq == 1
                             else jnp.concatenate(cols, axis=0))
            xop = parts[0] if len(parts) == 1 else jnp.concatenate(parts, axis=1)
            acc = jnp.dot(xop, wps[p][0], preferred_element_type=jnp.float32)
            outp = jax.nn.gelu(acc + bias,
                               approximate=True).astype(jnp.bfloat16)
            for q in range(nq):
                new_blocks[q * S + p] = jax.lax.slice_in_dim(
                    outp, q * L0, (q + 1) * L0, axis=0)
        blocks = new_blocks

    # ---- fused output head: [p|n] or [mu|var] as one wide matmul ------------
    up = blocks[0] if len(blocks) == 1 else jnp.concatenate(blocks, axis=0)
    y = jnp.dot(up, w_head_ref[0],
                preferred_element_type=jnp.float32) + b_head_ref[0]      # (L1, 2F1p)
    first = jax.lax.slice_in_dim(y, 0, f1_pad, axis=1)
    second = jax.lax.slice_in_dim(y, f1_pad, 2 * f1_pad, axis=1)
    first = jnp.where(tower == 0, jax.nn.sigmoid(first), first)   # p vs mu
    second = jax.nn.softplus(second)                              # n / var
    out_ref[0, 0] = jnp.concatenate([first, second], axis=1)


# --------------------------------------------------------------------------
# Host-side weight preparation (one-time; hoist out of the serving loop)
# --------------------------------------------------------------------------
def _compute_phase_taps(Wk, S, pad):
    taps = []
    for p in range(S):
        taps.append([(k, (k - pad - p) // S)
                     for k in range(Wk) if (k - pad - p) % S == 0])
    return taps


def build_decoder_weights(params, cfg):
    """Channel padding to 128 lanes, bf16 cast of matmul operands, per-phase
    tap stacking (residual 1x1 deconv folded into the d=0 tap of phase 0),
    tower stacking, and fused [p|n] / [mu|var] head weights."""
    F1 = cfg['signal_dim']
    MD = cfg['metadata_embedding_dim']
    S = cfg['pool_size']
    Wk = cfg['conv_kernel_size']
    n_layers = cfg['n_cnn_layers']
    ex = cfg['expansion_factor']
    pad = (Wk - 1) // 2
    F2 = F1 * ex ** n_layers
    F1p, MDp, F2p = _rup(F1), _rup(MD), _rup(F2)

    taps = _compute_phase_taps(Wk, S, pad)

    w = dict(
        w_emb=_pad2(params['w_emb'], F1p, MDp).astype(jnp.bfloat16),
        b_emb=_pad1(params['b_emb'], MDp).reshape(1, MDp).astype(jnp.float32),
        w_src=_pad2(params['w_fus_src'], F2p, F2p).astype(jnp.bfloat16),
        w_md=_pad2(params['w_fus_md'], MDp, F2p).astype(jnp.bfloat16),
        b_fus=_pad1(params['b_fus'], F2p).reshape(1, F2p).astype(jnp.float32),
        gamma=_pad1(params['ln_gamma'], F2p).reshape(1, F2p).astype(jnp.float32),
        beta=_pad1(params['ln_beta'], F2p).reshape(1, F2p).astype(jnp.float32),
    )

    layers = []
    for l in range(n_layers):
        c_in = params['deconv_c'][l]['w'].shape[1]
        c_out = params['deconv_c'][l]['w'].shape[2]
        c_inp, c_outp = _rup(c_in), _rup(c_out)
        per_phase_w = []
        for p in range(S):
            tower_mats = []
            for name in ('deconv_c', 'deconv_p'):
                lp = params[name][l]
                mats = []
                if taps[p]:
                    for (k, d) in taps[p]:
                        wk = lp['w'][k]
                        if p == 0 and d == 0:
                            wk = wk + lp['wr']      # fold residual 1x1 deconv
                        mats.append(_pad2(wk, c_inp, c_outp))
                else:
                    # phase with no conv taps (only possible when S > Wk)
                    mats.append(jnp.zeros((c_inp, c_outp), jnp.float32))
                tower_mats.append(jnp.concatenate(mats, axis=0))
            per_phase_w.append(jnp.stack(tower_mats, axis=0).astype(jnp.bfloat16))
        bias = jnp.stack(
            [_pad1(params[name][l]['b'] + params[name][l]['br'], c_outp)
             for name in ('deconv_c', 'deconv_p')], axis=0,
        ).reshape(2, 1, c_outp).astype(jnp.float32)
        layers.append((per_phase_w, bias))
    w['layers'] = layers

    def head(w_a, b_a, w_b, b_b):
        wm = jnp.zeros((F1p, 2 * F1p), jnp.float32)
        wm = wm.at[:F1, :F1].set(w_a).at[:F1, F1p:F1p + F1].set(w_b)
        bm = jnp.zeros((2 * F1p,), jnp.float32)
        bm = bm.at[:F1].set(b_a).at[F1p:F1p + F1].set(b_b)
        return wm, bm

    wc, bc = head(params['w_p'], params['b_p'], params['w_n'], params['b_n'])
    wg, bg = head(params['w_mu'], params['b_mu'], params['w_var'], params['b_var'])
    w['w_head'] = jnp.stack([wc, wg], axis=0).astype(jnp.bfloat16)
    w['b_head'] = jnp.stack([bc, bg], axis=0).reshape(2, 1, 2 * F1p).astype(jnp.float32)
    w['dims'] = dict(F1=F1, F1p=F1p, F2=F2, F2p=F2p, MDp=MDp)
    w['phase_ds'] = tuple(tuple(d for (_, d) in tp) if tp else (0,)
                          for tp in taps)
    return w


# --------------------------------------------------------------------------
# Wrapper
# --------------------------------------------------------------------------
def dino_candi_decoder(src, y_metadata, weights, cfg):
    B, L2, F2 = src.shape
    S = cfg['pool_size']
    n_layers = cfg['n_cnn_layers']
    nq = S ** n_layers
    L1 = L2 * nq
    d = weights['dims']
    F1, F1p, F2p, MDp = d['F1'], d['F1p'], d['F2p'], d['MDp']

    src_p = jnp.pad(src.astype(jnp.float32), ((0, 0), (0, 0), (0, F2p - F2)))
    ymd_p = jnp.pad(y_metadata.astype(jnp.float32),
                    ((0, 0), (0, F1p - F1))).reshape(B, 1, F1p)

    inputs = [src_p, ymd_p,
              weights['w_emb'], weights['b_emb'],
              weights['w_src'], weights['w_md'], weights['b_fus'],
              weights['gamma'], weights['beta']]
    in_specs = [
        pl.BlockSpec((1, L2, F2p), lambda t, b: (b, 0, 0)),
        pl.BlockSpec((1, 1, F1p), lambda t, b: (b, 0, 0)),
    ]

    def const_spec(a):
        return pl.BlockSpec(a.shape, lambda t, b, _n=a.ndim: (0,) * _n)

    def tower_spec(a):
        return pl.BlockSpec((1,) + tuple(a.shape[1:]),
                            lambda t, b, _n=a.ndim: (t,) + (0,) * (_n - 1))

    in_specs += [const_spec(a) for a in inputs[2:]]

    for per_phase_w, bias in weights['layers']:
        for wp in per_phase_w:
            inputs.append(wp)
            in_specs.append(tower_spec(wp))
        inputs.append(bias)
        in_specs.append(tower_spec(bias))
    inputs += [weights['w_head'], weights['b_head']]
    in_specs += [tower_spec(weights['w_head']), tower_spec(weights['b_head'])]

    out_shape = jax.ShapeDtypeStruct((2, B, L1, 2 * F1p), jnp.float32)
    out_specs = pl.BlockSpec((1, 1, L1, 2 * F1p), lambda t, b: (t, b, 0, 0))

    # rough advisory cost estimate (helps XLA schedule around the kernel)
    flops = 2 * 2 * B * (F1p * MDp + MDp * F2p + L2 * F2p * F2p)
    transc = 0
    M = L2
    for per_phase_w, _ in weights['layers']:
        c_outp = int(per_phase_w[0].shape[2])
        for wp in per_phase_w:
            flops += 2 * 2 * B * M * int(wp.shape[1]) * c_outp
        M *= S
        transc += 2 * B * M * c_outp
    flops += 2 * 2 * B * L1 * F1p * 2 * F1p
    transc += 2 * B * L1 * 2 * F1p
    bytes_accessed = sum(int(np.prod(a.shape)) * a.dtype.itemsize for a in inputs)
    bytes_accessed += 2 * B * L1 * 2 * F1p * 4

    kern = functools.partial(_decoder_kernel, n_layers=n_layers, S=S,
                             phase_ds=weights['phase_ds'],
                             f2_real=float(d['F2']), f1_pad=F1p)
    out = pl.pallas_call(
        kern,
        out_shape=out_shape,
        grid=(2, B),
        in_specs=in_specs,
        out_specs=out_specs,
        compiler_params=pltpu.CompilerParams(
            dimension_semantics=("parallel", "parallel"),
            vmem_limit_bytes=64 * 1024 * 1024),
        cost_estimate=pl.CostEstimate(flops=int(flops),
                                      transcendentals=int(transc),
                                      bytes_accessed=int(bytes_accessed)),
    )(*inputs)

    # Kernel rows are phase-block-major (row q*L2 + a == position a*nq + q);
    # undo that permutation and strip the lane padding on the host.
    out = out.reshape(2, B, nq, L2, 2 * F1p)
    out = jnp.transpose(out, (0, 1, 3, 2, 4)).reshape(2, B, L1, 2 * F1p)
    cn, mv = out[0], out[1]
    p = cn[..., :F1]
    n = cn[..., F1p:F1p + F1]
    mu = mv[..., :F1]
    var = mv[..., F1p:F1p + F1]
    return p, n, mu, var


# --------------------------------------------------------------------------
# Deterministic parameter init (synthetic, not a checkpoint load)
# --------------------------------------------------------------------------
def init_params(key, cfg):
    f1 = cfg['signal_dim']
    md = cfg['metadata_embedding_dim']
    n_layers = cfg['n_cnn_layers']
    ex = cfg['expansion_factor']
    Wk = cfg['conv_kernel_size']
    f2 = f1 * ex ** n_layers

    keys = iter(jax.random.split(key, 64))

    def w(shape, scale=0.1):
        return (scale * jax.random.normal(next(keys), shape)).astype(jnp.float32)

    params = dict(
        w_emb=w((f1, md)), b_emb=w((md,), 0.01),
        w_fus_src=w((f2, f2)), w_fus_md=w((md, f2)), b_fus=w((f2,), 0.01),
        ln_gamma=jnp.ones((f2,), jnp.float32),
        ln_beta=jnp.zeros((f2,), jnp.float32),
    )
    conv_channels = [f1 * ex ** l for l in range(n_layers)]
    rev = [ex * c for c in conv_channels[::-1]]
    for name in ('deconv_c', 'deconv_p'):
        layers = []
        for i in range(n_layers):
            c_in = rev[i]
            c_out = rev[i + 1] if i + 1 < n_layers else rev[i] // ex
            layers.append(dict(w=w((Wk, c_in, c_out)), b=w((c_out,), 0.01),
                               wr=w((c_in, c_out)), br=w((c_out,), 0.01)))
        params[name] = layers
    for hname in ('p', 'n', 'mu', 'var'):
        params[f'w_{hname}'] = w((f1, f1))
        params[f'b_{hname}'] = w((f1,), 0.01)
    return params


# --------------------------------------------------------------------------
# Pure-JAX reference (independent formulation) for a correctness check
# --------------------------------------------------------------------------
def _ref_deconv(x, w, b, wr, br, S, pad):
    B, L, _ = x.shape
    Wk, _, Cout = w.shape
    Lout = L * S
    y = jnp.zeros((B, Lout, Cout), jnp.float32)
    for l in range(L):
        for k in range(Wk):
            t = l * S + k - pad
            if 0 <= t < Lout:
                y = y.at[:, t].add(x[:, l] @ w[k])
        y = y.at[:, l * S].add(x[:, l] @ wr)
    y = y + b + br
    return jax.nn.gelu(y, approximate=True)


def _ref_forward(src, ymd, params, cfg):
    S = cfg['pool_size']
    pad = (cfg['conv_kernel_size'] - 1) // 2
    emb = ymd @ params['w_emb'] + params['b_emb']
    w_full = jnp.concatenate([params['w_fus_src'], params['w_fus_md']], axis=0)
    cat = jnp.concatenate(
        [src, jnp.broadcast_to(emb[:, None, :], (src.shape[0], src.shape[1],
                                                 emb.shape[1]))], axis=-1)
    h = cat @ w_full + params['b_fus']
    mean = h.mean(-1, keepdims=True)
    var = ((h - mean) ** 2).mean(-1, keepdims=True)
    h = (h - mean) / jnp.sqrt(var + 1e-5) * params['ln_gamma'] + params['ln_beta']
    up_c, up_p = h, h
    for lp in params['deconv_c']:
        up_c = _ref_deconv(up_c, lp['w'], lp['b'], lp['wr'], lp['br'], S, pad)
    for lp in params['deconv_p']:
        up_p = _ref_deconv(up_p, lp['w'], lp['b'], lp['wr'], lp['br'], S, pad)
    p = jax.nn.sigmoid(up_c @ params['w_p'] + params['b_p'])
    n = jax.nn.softplus(up_c @ params['w_n'] + params['b_n'])
    mu = up_p @ params['w_mu'] + params['b_mu']
    var_o = jax.nn.softplus(up_p @ params['w_var'] + params['b_var'])
    return p, n, mu, var_o


if __name__ == "__main__":
    cfg = dict(signal_dim=4, metadata_embedding_dim=8, conv_kernel_size=3,
               n_cnn_layers=2, context_length=16, pool_size=2,
               expansion_factor=3)
    f2 = cfg['signal_dim'] * cfg['expansion_factor'] ** cfg['n_cnn_layers']
    l2 = cfg['context_length'] // cfg['pool_size'] ** cfg['n_cnn_layers']
    B = 2

    key = jax.random.PRNGKey(0)
    k1, k2, k3 = jax.random.split(key, 3)
    src = jax.random.normal(k1, (B, l2, f2), jnp.float32)          # (2, 4, 36)
    y_metadata = jax.random.normal(k2, (B, cfg['signal_dim']), jnp.float32)
    params = init_params(k3, cfg)

    weights = build_decoder_weights(params, cfg)   # one-time host prep
    p, n, mu, var = dino_candi_decoder(src, y_metadata, weights, cfg)
    jax.block_until_ready((p, n, mu, var))

    assert p.shape == (B, cfg['context_length'], cfg['signal_dim'])
    assert n.shape == mu.shape == var.shape == p.shape

    rp, rn, rmu, rvar = _ref_forward(src, y_metadata, params, cfg)
    # bf16 matmul operands -> slightly looser tolerance than a pure-f32 kernel
    for a, r in ((p, rp), (n, rn), (mu, rmu), (var, rvar)):
        np.testing.assert_allclose(np.asarray(a), np.asarray(r),
                                   rtol=2e-2, atol=2e-2)

    print("KERNEL_OK")
</pallas_src>

<mosaic_0001>
module attributes {stable_mosaic.version = 11 : i64} {
  func.func @_decoder_kernel(%arg0: i32, %arg1: i32, %arg2: memref<1x4x128xf32, #tpu.memory_space<vmem>>, %arg3: memref<1x1x128xf32, #tpu.memory_space<vmem>>, %arg4: memref<128x128xbf16, #tpu.memory_space<vmem>>, %arg5: memref<1x128xf32, #tpu.memory_space<vmem>>, %arg6: memref<128x128xbf16, #tpu.memory_space<vmem>>, %arg7: memref<128x128xbf16, #tpu.memory_space<vmem>>, %arg8: memref<1x128xf32, #tpu.memory_space<vmem>>, %arg9: memref<1x128xf32, #tpu.memory_space<vmem>>, %arg10: memref<1x128xf32, #tpu.memory_space<vmem>>, %arg11: memref<1x128x128xbf16, #tpu.memory_space<vmem>>, %arg12: memref<1x256x128xbf16, #tpu.memory_space<vmem>>, %arg13: memref<1x1x128xf32, #tpu.memory_space<vmem>>, %arg14: memref<1x128x128xbf16, #tpu.memory_space<vmem>>, %arg15: memref<1x256x128xbf16, #tpu.memory_space<vmem>>, %arg16: memref<1x1x128xf32, #tpu.memory_space<vmem>>, %arg17: memref<1x128x256xbf16, #tpu.memory_space<vmem>>, %arg18: memref<1x1x256xf32, #tpu.memory_space<vmem>>, %arg19: memref<1x1x16x256xf32, #tpu.memory_space<vmem>>) attributes {dimension_semantics = [#tpu.dimension_semantics<parallel>, #tpu.dimension_semantics<parallel>], iteration_bounds = array<i64: 2, 2>, scalar_prefetch = 0 : i64, scratch_operands = 0 : i64, tpu.core_type = #tpu.core_type<tc>, window_params = [{transform_indices = @transform_0, window_bounds = array<i64: 1, 4, 128>}, {transform_indices = @transform_1, window_bounds = array<i64: 1, 1, 128>}, {pipeline_mode = #tpu.pipeline_mode<synchronous>, transform_indices = @transform_2, window_bounds = array<i64: 128, 128>}, {pipeline_mode = #tpu.pipeline_mode<synchronous>, transform_indices = @transform_3, window_bounds = array<i64: 1, 128>}, {pipeline_mode = #tpu.pipeline_mode<synchronous>, transform_indices = @transform_4, window_bounds = array<i64: 128, 128>}, {pipeline_mode = #tpu.pipeline_mode<synchronous>, transform_indices = @transform_5, window_bounds = array<i64: 128, 128>}, {pipeline_mode = #tpu.pipeline_mode<synchronous>, transform_indices = @transform_6, window_bounds = array<i64: 1, 128>}, {pipeline_mode = #tpu.pipeline_mode<synchronous>, transform_indices = @transform_7, window_bounds = array<i64: 1, 128>}, {pipeline_mode = #tpu.pipeline_mode<synchronous>, transform_indices = @transform_8, window_bounds = array<i64: 1, 128>}, {transform_indices = @transform_9, window_bounds = array<i64: 1, 128, 128>}, {transform_indices = @transform_10, window_bounds = array<i64: 1, 256, 128>}, {transform_indices = @transform_11, window_bounds = array<i64: 1, 1, 128>}, {transform_indices = @transform_12, window_bounds = array<i64: 1, 128, 128>}, {transform_indices = @transform_13, window_bounds = array<i64: 1, 256, 128>}, {transform_indices = @transform_14, window_bounds = array<i64: 1, 1, 128>}, {transform_indices = @transform_15, window_bounds = array<i64: 1, 128, 256>}, {transform_indices = @transform_16, window_bounds = array<i64: 1, 1, 256>}, {transform_indices = @transform_17, window_bounds = array<i64: 1, 1, 16, 256>}]} {
    %c0 = arith.constant 0 : index
    %c0_0 = arith.constant 0 : index
    %c0_1 = arith.constant 0 : index
    %0 = vector.load %arg3[%c0, %c0_0, %c0_1] : memref<1x1x128xf32, #tpu.memory_space<vmem>>, vector<1x1x128xf32>
    %1 = vector.shape_cast %0 : vector<1x1x128xf32> to vector<1x128xf32>
    %2 = arith.truncf %1 : vector<1x128xf32> to vector<1x128xbf16>
    %c0_2 = arith.constant 0 : index
    %c0_3 = arith.constant 0 : index
    %3 = vector.load %arg4[%c0_2, %c0_3] : memref<128x128xbf16, #tpu.memory_space<vmem>>, vector<128x128xbf16>
    %cst = arith.constant dense<0.000000e+00> : vector<1x128xf32>
    %4 = tpu.matmul %2, %3, %cst {dimension_numbers = #tpu.dot_dimension_numbers<[1], [0], [0], [1], [0, 0, 1, 1], [], []>} : vector<1x128xbf16>, vector<128x128xbf16>, vector<1x128xf32> -> vector<1x128xf32>
    %c0_4 = arith.constant 0 : index
    %c0_5 = arith.constant 0 : index
    %5 = vector.load %arg5[%c0_4, %c0_5] : memref<1x128xf32, #tpu.memory_space<vmem>>, vector<1x128xf32>
    %6 = arith.addf %4, %5 : vector<1x128xf32>
    %7 = arith.truncf %6 : vector<1x128xf32> to vector<1x128xbf16>
    %c0_6 = arith.constant 0 : index
    %c0_7 = arith.constant 0 : index
    %8 = vector.load %arg7[%c0_6, %c0_7] : memref<128x128xbf16, #tpu.memory_space<vmem>>, vector<128x128xbf16>
    %cst_8 = arith.constant dense<0.000000e+00> : vector<1x128xf32>
    %9 = tpu.matmul %7, %8, %cst_8 {dimension_numbers = #tpu.dot_dimension_numbers<[1], [0], [0], [1], [0, 0, 1, 1], [], []>} : vector<1x128xbf16>, vector<128x128xbf16>, vector<1x128xf32> -> vector<1x128xf32>
    %c0_9 = arith.constant 0 : index
    %c0_10 = arith.constant 0 : index
    %c0_11 = arith.constant 0 : index
    %10 = vector.load %arg2[%c0_9, %c0_10, %c0_11] : memref<1x4x128xf32, #tpu.memory_space<vmem>>, vector<1x4x128xf32>
    %11 = vector.shape_cast %10 : vector<1x4x128xf32> to vector<4x128xf32>
    %12 = arith.truncf %11 : vector<4x128xf32> to vector<4x128xbf16>
    %c0_12 = arith.constant 0 : index
    %c0_13 = arith.constant 0 : index
    %13 = vector.load %arg6[%c0_12, %c0_13] : memref<128x128xbf16, #tpu.memory_space<vmem>>, vector<128x128xbf16>
    %cst_14 = arith.constant dense<0.000000e+00> : vector<4x128xf32>
    %14 = tpu.matmul %12, %13, %cst_14 {dimension_numbers = #tpu.dot_dimension_numbers<[1], [0], [0], [1], [0, 0, 1, 1], [], []>} : vector<4x128xbf16>, vector<128x128xbf16>, vector<4x128xf32> -> vector<4x128xf32>
    %15 = vector.broadcast %9 : vector<1x128xf32> to vector<4x128xf32>
    %16 = arith.addf %14, %15 : vector<4x128xf32>
    %c0_15 = arith.constant 0 : index
    %c0_16 = arith.constant 0 : index
    %17 = vector.load %arg8[%c0_15, %c0_16] : memref<1x128xf32, #tpu.memory_space<vmem>>, vector<1x128xf32>
    %18 = vector.broadcast %17 : vector<1x128xf32> to vector<4x128xf32>
    %19 = arith.addf %16, %18 : vector<4x128xf32>
    %cst_17 = arith.constant dense<0.000000e+00> : vector<4xf32>
    %20 = vector.multi_reduction <add>, %19, %cst_17 [1] : vector<4x128xf32> to vector<4xf32>
    %21 = vector.shape_cast %20 : vector<4xf32> to vector<4x1xf32>
    %cst_18 = arith.constant 0.027777778 : f32
    %22 = vector.broadcast %cst_18 : f32 to vector<4x1xf32>
    %23 = arith.mulf %21, %22 : vector<4x1xf32>
    %24 = arith.mulf %19, %19 : vector<4x128xf32>
    %cst_19 = arith.constant dense<0.000000e+00> : vector<4xf32>
    %25 = vector.multi_reduction <add>, %24, %cst_19 [1] : vector<4x128xf32> to vector<4xf32>
    %26 = vector.shape_cast %25 : vector<4xf32> to vector<4x1xf32>
    %cst_20 = arith.constant 0.027777778 : f32
    %27 = vector.broadcast %cst_20 : f32 to vector<4x1xf32>
    %28 = arith.mulf %26, %27 : vector<4x1xf32>
    %29 = arith.mulf %23, %23 : vector<4x1xf32>
    %30 = arith.subf %28, %29 : vector<4x1xf32>
    %31 = vector.broadcast %23 : vector<4x1xf32> to vector<4x128xf32>
    %32 = arith.subf %19, %31 : vector<4x128xf32>
    %cst_21 = arith.constant 9.99999974E-6 : f32
    %33 = vector.broadcast %cst_21 : f32 to vector<4x1xf32>
    %34 = arith.addf %30, %33 : vector<4x1xf32>
    %35 = math.rsqrt %34 : vector<4x1xf32>
    %36 = vector.broadcast %35 : vector<4x1xf32> to vector<4x128xf32>
    %37 = arith.mulf %32, %36 : vector<4x128xf32>
    %c0_22 = arith.constant 0 : index
    %c0_23 = arith.constant 0 : index
    %38 = vector.load %arg9[%c0_22, %c0_23] : memref<1x128xf32, #tpu.memory_space<vmem>>, vector<1x128xf32>
    %39 = vector.broadcast %38 : vector<1x128xf32> to vector<4x128xf32>
    %40 = arith.mulf %37, %39 : vector<4x128xf32>
    %c0_24 = arith.constant 0 : index
    %c0_25 = arith.constant 0 : index
    %41 = vector.load %arg10[%c0_24, %c0_25] : memref<1x128xf32, #tpu.memory_space<vmem>>, vector<1x128xf32>
    %42 = vector.broadcast %41 : vector<1x128xf32> to vector<4x128xf32>
    %43 = arith.addf %40, %42 : vector<4x128xf32>
    %44 = arith.truncf %43 : vector<4x128xf32> to vector<4x128xbf16>
    %c0_26 = arith.constant 0 : index
    %c0_27 = arith.constant 0 : index
    %c0_28 = arith.constant 0 : index
    %45 = vector.load %arg13[%c0_26, %c0_27, %c0_28] : memref<1x1x128xf32, #tpu.memory_space<vmem>>, vector<1x1x128xf32>
    %46 = vector.shape_cast %45 : vector<1x1x128xf32> to vector<1x128xf32>
    %c0_29 = arith.constant 0 : index
    %c0_30 = arith.constant 0 : index
    %c0_31 = arith.constant 0 : index
    %47 = vector.load %arg11[%c0_29, %c0_30, %c0_31] : memref<1x128x128xbf16, #tpu.memory_space<vmem>>, vector<1x128x128xbf16>
    %48 = vector.shape_cast %47 : vector<1x128x128xbf16> to vector<128x128xbf16>
    %cst_32 = arith.constant dense<0.000000e+00> : vector<4x128xf32>
    %49 = tpu.matmul %44, %48, %cst_32 {dimension_numbers = #tpu.dot_dimension_numbers<[1], [0], [0], [1], [0, 0, 1, 1], [], []>} : vector<4x128xbf16>, vector<128x128xbf16>, vector<4x128xf32> -> vector<4x128xf32>
    %50 = vector.broadcast %46 : vector<1x128xf32> to vector<4x128xf32>
    %51 = arith.addf %49, %50 : vector<4x128xf32>
    %52 = arith.mulf %51, %51 : vector<4x128xf32>
    %53 = arith.mulf %51, %52 : vector<4x128xf32>
    %cst_33 = arith.constant 4.471500e-02 : f32
    %54 = vector.broadcast %cst_33 : f32 to vector<4x128xf32>
    %55 = arith.mulf %54, %53 : vector<4x128xf32>
    %56 = arith.addf %51, %55 : vector<4x128xf32>
    %cst_34 = arith.constant 0.797884583 : f32
    %57 = vector.broadcast %cst_34 : f32 to vector<4x128xf32>
    %58 = arith.mulf %57, %56 : vector<4x128xf32>
    %59 = math.tanh %58 : vector<4x128xf32>
    %cst_35 = arith.constant 1.000000e+00 : f32
    %60 = vector.broadcast %cst_35 : f32 to vector<4x128xf32>
    %61 = arith.addf %60, %59 : vector<4x128xf32>
    %cst_36 = arith.constant 5.000000e-01 : f32
    %62 = vector.broadcast %cst_36 : f32 to vector<4x128xf32>
    %63 = arith.mulf %62, %61 : vector<4x128xf32>
    %64 = arith.mulf %51, %63 : vector<4x128xf32>
    %65 = arith.truncf %64 : vector<4x128xf32> to vector<4x128xbf16>
    %66 = vector.extract_strided_slice %65 {offsets = [0, 0], sizes = [4, 128], strides = [1, 1]} : vector<4x128xbf16> to vector<4x128xbf16>
    %cst_37 = arith.constant 0.000000e+00 : bf16
    %67 = vector.broadcast %cst_37 : bf16 to vector<1x128xbf16>
    %68 = vector.extract_strided_slice %44 {offsets = [1, 0], sizes = [3, 128], strides = [1, 1]} : vector<4x128xbf16> to vector<3x128xbf16>
    %69 = tpu.concatenate %68, %67 in 0 : vector<3x128xbf16>, vector<1x128xbf16> -> vector<4x128xbf16>
    %70 = tpu.concatenate %69, %44 in 1 : vector<4x128xbf16>, vector<4x128xbf16> -> vector<4x256xbf16>
    %c0_38 = arith.constant 0 : index
    %c0_39 = arith.constant 0 : index
    %c0_40 = arith.constant 0 : index
    %71 = vector.load %arg12[%c0_38, %c0_39, %c0_40] : memref<1x256x128xbf16, #tpu.memory_space<vmem>>, vector<1x256x128xbf16>
    %72 = vector.shape_cast %71 : vector<1x256x128xbf16> to vector<256x128xbf16>
    %cst_41 = arith.constant dense<0.000000e+00> : vector<4x128xf32>
    %73 = tpu.matmul %70, %72, %cst_41 {dimension_numbers = #tpu.dot_dimension_numbers<[1], [0], [0], [1], [0, 0, 1, 1], [], []>} : vector<4x256xbf16>, vector<256x128xbf16>, vector<4x128xf32> -> vector<4x128xf32>
    %74 = vector.broadcast %46 : vector<1x128xf32> to vector<4x128xf32>
    %75 = arith.addf %73, %74 : vector<4x128xf32>
    %76 = arith.mulf %75, %75 : vector<4x128xf32>
    %77 = arith.mulf %75, %76 : vector<4x128xf32>
    %cst_42 = arith.constant 4.471500e-02 : f32
    %78 = vector.broadcast %cst_42 : f32 to vector<4x128xf32>
    %79 = arith.mulf %78, %77 : vector<4x128xf32>
    %80 = arith.addf %75, %79 : vector<4x128xf32>
    %cst_43 = arith.constant 0.797884583 : f32
    %81 = vector.broadcast %cst_43 : f32 to vector<4x128xf32>
    %82 = arith.mulf %81, %80 : vector<4x128xf32>
    %83 = math.tanh %82 : vector<4x128xf32>
    %cst_44 = arith.constant 1.000000e+00 : f32
    %84 = vector.broadcast %cst_44 : f32 to vector<4x128xf32>
    %85 = arith.addf %84, %83 : vector<4x128xf32>
    %cst_45 = arith.constant 5.000000e-01 : f32
    %86 = vector.broadcast %cst_45 : f32 to vector<4x128xf32>
    %87 = arith.mulf %86, %85 : vector<4x128xf32>
    %88 = arith.mulf %75, %87 : vector<4x128xf32>
    %89 = arith.truncf %88 : vector<4x128xf32> to vector<4x128xbf16>
    %90 = vector.extract_strided_slice %89 {offsets = [0, 0], sizes = [4, 128], strides = [1, 1]} : vector<4x128xbf16> to vector<4x128xbf16>
    %c0_46 = arith.constant 0 : index
    %c0_47 = arith.constant 0 : index
    %c0_48 = arith.constant 0 : index
    %91 = vector.load %arg16[%c0_46, %c0_47, %c0_48] : memref<1x1x128xf32, #tpu.memory_space<vmem>>, vector<1x1x128xf32>
    %92 = vector.shape_cast %91 : vector<1x1x128xf32> to vector<1x128xf32>
    %93 = tpu.concatenate %66, %90 in 0 : vector<4x128xbf16>, vector<4x128xbf16> -> vector<8x128xbf16>
    %c0_49 = arith.constant 0 : index
    %c0_50 = arith.constant 0 : index
    %c0_51 = arith.constant 0 : index
    %94 = vector.load %arg14[%c0_49, %c0_50, %c0_51] : memref<1x128x128xbf16, #tpu.memory_space<vmem>>, vector<1x128x128xbf16>
    %95 = vector.shape_cast %94 : vector<1x128x128xbf16> to vector<128x128xbf16>
    %cst_52 = arith.constant dense<0.000000e+00> : vector<8x128xf32>
    %96 = tpu.matmul %93, %95, %cst_52 {dimension_numbers = #tpu.dot_dimension_numbers<[1], [0], [0], [1], [0, 0, 1, 1], [], []>} : vector<8x128xbf16>, vector<128x128xbf16>, vector<8x128xf32> -> vector<8x128xf32>
    %97 = vector.broadcast %92 : vector<1x128xf32> to vector<8x128xf32>
    %98 = arith.addf %96, %97 : vector<8x128xf32>
    %99 = arith.mulf %98, %98 : vector<8x128xf32>
    %100 = arith.mulf %98, %99 : vector<8x128xf32>
    %cst_53 = arith.constant 4.471500e-02 : f32
    %101 = vector.broadcast %cst_53 : f32 to vector<8x128xf32>
    %102 = arith.mulf %101, %100 : vector<8x128xf32>
    %103 = arith.addf %98, %102 : vector<8x128xf32>
    %cst_54 = arith.constant 0.797884583 : f32
    %104 = vector.broadcast %cst_54 : f32 to vector<8x128xf32>
    %105 = arith.mulf %104, %103 : vector<8x128xf32>
    %106 = math.tanh %105 : vector<8x128xf32>
    %cst_55 = arith.constant 1.000000e+00 : f32
    %107 = vector.broadcast %cst_55 : f32 to vector<8x128xf32>
    %108 = arith.addf %107, %106 : vector<8x128xf32>
    %cst_56 = arith.constant 5.000000e-01 : f32
    %109 = vector.broadcast %cst_56 : f32 to vector<8x128xf32>
    %110 = arith.mulf %109, %108 : vector<8x128xf32>
    %111 = arith.mulf %98, %110 : vector<8x128xf32>
    %112 = arith.truncf %111 : vector<8x128xf32> to vector<8x128xbf16>
    %113 = vector.extract_strided_slice %112 {offsets = [0, 0], sizes = [4, 128], strides = [1, 1]} : vector<8x128xbf16> to vector<4x128xbf16>
    %114 = vector.extract_strided_slice %112 {offsets = [4, 0], sizes = [4, 128], strides = [1, 1]} : vector<8x128xbf16> to vector<4x128xbf16>
    %cst_57 = arith.constant 0.000000e+00 : bf16
    %115 = vector.broadcast %cst_57 : bf16 to vector<1x128xbf16>
    %116 = vector.extract_strided_slice %66 {offsets = [1, 0], sizes = [3, 128], strides = [1, 1]} : vector<4x128xbf16> to vector<3x128xbf16>
    %117 = tpu.concatenate %116, %115 in 0 : vector<3x128xbf16>, vector<1x128xbf16> -> vector<4x128xbf16>
    %118 = tpu.concatenate %90, %117 in 0 : vector<4x128xbf16>, vector<4x128xbf16> -> vector<8x128xbf16>
    %119 = tpu.concatenate %66, %90 in 0 : vector<4x128xbf16>, vector<4x128xbf16> -> vector<8x128xbf16>
    %120 = tpu.concatenate %118, %119 in 1 : vector<8x128xbf16>, vector<8x128xbf16> -> vector<8x256xbf16>
    %c0_58 = arith.constant 0 : index
    %c0_59 = arith.constant 0 : index
    %c0_60 = arith.constant 0 : index
    %121 = vector.load %arg15[%c0_58, %c0_59, %c0_60] : memref<1x256x128xbf16, #tpu.memory_space<vmem>>, vector<1x256x128xbf16>
    %122 = vector.shape_cast %121 : vector<1x256x128xbf16> to vector<256x128xbf16>
    %cst_61 = arith.constant dense<0.000000e+00> : vector<8x128xf32>
    %123 = tpu.matmul %120, %122, %cst_61 {dimension_numbers = #tpu.dot_dimension_numbers<[1], [0], [0], [1], [0, 0, 1, 1], [], []>} : vector<8x256xbf16>, vector<256x128xbf16>, vector<8x128xf32> -> vector<8x128xf32>
    %124 = vector.broadcast %92 : vector<1x128xf32> to vector<8x128xf32>
    %125 = arith.addf %123, %124 : vector<8x128xf32>
    %126 = arith.mulf %125, %125 : vector<8x128xf32>
    %127 = arith.mulf %125, %126 : vector<8x128xf32>
    %cst_62 = arith.constant 4.471500e-02 : f32
    %128 = vector.broadcast %cst_62 : f32 to vector<8x128xf32>
    %129 = arith.mulf %128, %127 : vector<8x128xf32>
    %130 = arith.addf %125, %129 : vector<8x128xf32>
    %cst_63 = arith.constant 0.797884583 : f32
    %131 = vector.broadcast %cst_63 : f32 to vector<8x128xf32>
    %132 = arith.mulf %131, %130 : vector<8x128xf32>
    %133 = math.tanh %132 : vector<8x128xf32>
    %cst_64 = arith.constant 1.000000e+00 : f32
    %134 = vector.broadcast %cst_64 : f32 to vector<8x128xf32>
    %135 = arith.addf %134, %133 : vector<8x128xf32>
    %cst_65 = arith.constant 5.000000e-01 : f32
    %136 = vector.broadcast %cst_65 : f32 to vector<8x128xf32>
    %137 = arith.mulf %136, %135 : vector<8x128xf32>
    %138 = arith.mulf %125, %137 : vector<8x128xf32>
    %139 = arith.truncf %138 : vector<8x128xf32> to vector<8x128xbf16>
    %140 = vector.extract_strided_slice %139 {offsets = [0, 0], sizes = [4, 128], strides = [1, 1]} : vector<8x128xbf16> to vector<4x128xbf16>
    %141 = vector.extract_strided_slice %139 {offsets = [4, 0], sizes = [4, 128], strides = [1, 1]} : vector<8x128xbf16> to vector<4x128xbf16>
    %142 = tpu.concatenate %113, %140, %114, %141 in 0 : vector<4x128xbf16>, vector<4x128xbf16>, vector<4x128xbf16>, vector<4x128xbf16> -> vector<16x128xbf16>
    %c0_66 = arith.constant 0 : index
    %c0_67 = arith.constant 0 : index
    %c0_68 = arith.constant 0 : index
    %143 = vector.load %arg17[%c0_66, %c0_67, %c0_68] : memref<1x128x256xbf16, #tpu.memory_space<vmem>>, vector<1x128x256xbf16>
    %144 = vector.shape_cast %143 : vector<1x128x256xbf16> to vector<128x256xbf16>
    %cst_69 = arith.constant dense<0.000000e+00> : vector<16x256xf32>
    %145 = tpu.matmul %142, %144, %cst_69 {dimension_numbers = #tpu.dot_dimension_numbers<[1], [0], [0], [1], [0, 0, 1, 1], [], []>} : vector<16x128xbf16>, vector<128x256xbf16>, vector<16x256xf32> -> vector<16x256xf32>
    %c0_70 = arith.constant 0 : index
    %c0_71 = arith.constant 0 : index
    %c0_72 = arith.constant 0 : index
    %146 = vector.load %arg18[%c0_70, %c0_71, %c0_72] : memref<1x1x256xf32, #tpu.memory_space<vmem>>, vector<1x1x256xf32>
    %147 = vector.shape_cast %146 : vector<1x1x256xf32> to vector<1x256xf32>
    %148 = vector.broadcast %147 : vector<1x256xf32> to vector<16x256xf32>
    %149 = arith.addf %145, %148 : vector<16x256xf32>
    %150 = vector.extract_strided_slice %149 {offsets = [0, 0], sizes = [16, 128], strides = [1, 1]} : vector<16x256xf32> to vector<16x128xf32>
    %151 = vector.extract_strided_slice %149 {offsets = [0, 128], sizes = [16, 128], strides = [1, 1]} : vector<16x256xf32> to vector<16x128xf32>
    %c0_i32 = arith.constant 0 : i32
    %152 = arith.cmpi eq, %arg0, %c0_i32 : i32
    %153 = arith.negf %150 : vector<16x128xf32>
    %154 = math.exp %153 : vector<16x128xf32>
    %cst_73 = arith.constant 1.000000e+00 : f32
    %155 = vector.broadcast %cst_73 : f32 to vector<16x128xf32>
    %156 = arith.addf %155, %154 : vector<16x128xf32>
    %157 = arith.divf %155, %156 : vector<16x128xf32>
    %158 = arith.select %152, %157, %150 : vector<16x128xf32>
    %cst_74 = arith.constant 0.000000e+00 : f32
    %159 = vector.broadcast %cst_74 : f32 to vector<16x128xf32>
    %160 = arith.maximumf %151, %159 : vector<16x128xf32>
    %161 = vector.broadcast %cst_74 : f32 to vector<16x128xf32>
    %162 = arith.subf %151, %161 : vector<16x128xf32>
    %163 = arith.cmpf one, %162, %162 : vector<16x128xf32>
    %164 = vector.broadcast %cst_74 : f32 to vector<16x128xf32>
    %165 = arith.addf %151, %164 : vector<16x128xf32>
    %166 = math.absf %162 : vector<16x128xf32>
    %cst_75 = arith.constant 0.000000e+00 : f32
    %167 = vector.broadcast %cst_75 : f32 to vector<16x128xf32>
    %168 = arith.subf %167, %166 : vector<16x128xf32>
    %169 = math.exp %168 : vector<16x128xf32>
    %170 = math.log1p %169 : vector<16x128xf32>
    %171 = arith.addf %160, %170 : vector<16x128xf32>
    %172 = arith.select %163, %165, %171 : vector<16x128xi1>, vector<16x128xf32>
    %173 = tpu.concatenate %158, %172 in 1 : vector<16x128xf32>, vector<16x128xf32> -> vector<16x256xf32>
    %c0_76 = arith.constant 0 : index
    %c0_77 = arith.constant 0 : index
    %c0_78 = arith.constant 0 : index
    %c0_79 = arith.constant 0 : index
    %174 = vector.load %arg19[%c0_76, %c0_77, %c0_78, %c0_79] : memref<1x1x16x256xf32, #tpu.memory_space<vmem>>, vector<1x1x16x256xf32>
    %175 = vector.shape_cast %174 : vector<1x1x16x256xf32> to vector<16x256xf32>
    %176 = vector.shape_cast %173 : vector<16x256xf32> to vector<1x1x16x256xf32>
    tpu.vector_store %arg19[%c0_76, %c0_77, %c0_78, %c0_79], %176 {strides = array<i32>} : memref<1x1x16x256xf32, #tpu.memory_space<vmem>>, vector<1x1x16x256xf32>,
    return
  }
  func.func @transform_0(%arg0: i32, %arg1: i32) -> (i32, i32, i32) {
    %c0_i32 = arith.constant 0 : i32
    %c0_i32_0 = arith.constant 0 : i32
    %c0_i32_1 = arith.constant 0 : i32
    return %arg1, %c0_i32, %c0_i32_0 : i32, i32, i32
  }
  func.func @transform_1(%arg0: i32, %arg1: i32) -> (i32, i32, i32) {
    %c0_i32 = arith.constant 0 : i32
    %c0_i32_0 = arith.constant 0 : i32
    %c0_i32_1 = arith.constant 0 : i32
    return %arg1, %c0_i32, %c0_i32_0 : i32, i32, i32
  }
  func.func @transform_2(%arg0: i32, %arg1: i32) -> (i32, i32) {
    %c0_i32 = arith.constant 0 : i32
    %c0_i32_0 = arith.constant 0 : i32
    %c0_i32_1 = arith.constant 0 : i32
    return %c0_i32, %c0_i32_0 : i32, i32
  }
  func.func @transform_3(%arg0: i32, %arg1: i32) -> (i32, i32) {
    %c0_i32 = arith.constant 0 : i32
    %c0_i32_0 = arith.constant 0 : i32
    %c0_i32_1 = arith.constant 0 : i32
    return %c0_i32, %c0_i32_0 : i32, i32
  }
  func.func @transform_4(%arg0: i32, %arg1: i32) -> (i32, i32) {
    %c0_i32 = arith.constant 0 : i32
    %c0_i32_0 = arith.constant 0 : i32
    %c0_i32_1 = arith.constant 0 : i32
    return %c0_i32, %c0_i32_0 : i32, i32
  }
  func.func @transform_5(%arg0: i32, %arg1: i32) -> (i32, i32) {
    %c0_i32 = arith.constant 0 : i32
    %c0_i32_0 = arith.constant 0 : i32
    %c0_i32_1 = arith.constant 0 : i32
    return %c0_i32, %c0_i32_0 : i32, i32
  }
  func.func @transform_6(%arg0: i32, %arg1: i32) -> (i32, i32) {
    %c0_i32 = arith.constant 0 : i32
    %c0_i32_0 = arith.constant 0 : i32
    %c0_i32_1 = arith.constant 0 : i32
    return %c0_i32, %c0_i32_0 : i32, i32
  }
  func.func @transform_7(%arg0: i32, %arg1: i32) -> (i32, i32) {
    %c0_i32 = arith.constant 0 : i32
    %c0_i32_0 = arith.constant 0 : i32
    %c0_i32_1 = arith.constant 0 : i32
    return %c0_i32, %c0_i32_0 : i32, i32
  }
  func.func @transform_8(%arg0: i32, %arg1: i32) -> (i32, i32) {
    %c0_i32 = arith.constant 0 : i32
    %c0_i32_0 = arith.constant 0 : i32
    %c0_i32_1 = arith.constant 0 : i32
    return %c0_i32, %c0_i32_0 : i32, i32
  }
  func.func @transform_9(%arg0: i32, %arg1: i32) -> (i32, i32, i32) {
    %c0_i32 = arith.constant 0 : i32
    %c0_i32_0 = arith.constant 0 : i32
    %c0_i32_1 = arith.constant 0 : i32
    return %arg0, %c0_i32, %c0_i32_0 : i32, i32, i32
  }
  func.func @transform_10(%arg0: i32, %arg1: i32) -> (i32, i32, i32) {
    %c0_i32 = arith.constant 0 : i32
    %c0_i32_0 = arith.constant 0 : i32
    %c0_i32_1 = arith.constant 0 : i32
    return %arg0, %c0_i32, %c0_i32_0 : i32, i32, i32
  }
  func.func @transform_11(%arg0: i32, %arg1: i32) -> (i32, i32, i32) {
    %c0_i32 = arith.constant 0 : i32
    %c0_i32_0 = arith.constant 0 : i32
    %c0_i32_1 = arith.constant 0 : i32
    return %arg0, %c0_i32, %c0_i32_0 : i32, i32, i32
  }
  func.func @transform_12(%arg0: i32, %arg1: i32) -> (i32, i32, i32) {
    %c0_i32 = arith.constant 0 : i32
    %c0_i32_0 = arith.constant 0 : i32
    %c0_i32_1 = arith.constant 0 : i32
    return %arg0, %c0_i32, %c0_i32_0 : i32, i32, i32
  }
  func.func @transform_13(%arg0: i32, %arg1: i32) -> (i32, i32, i32) {
    %c0_i32 = arith.constant 0 : i32
    %c0_i32_0 = arith.constant 0 : i32
    %c0_i32_1 = arith.constant 0 : i32
    return %arg0, %c0_i32, %c0_i32_0 : i32, i32, i32
  }
  func.func @transform_14(%arg0: i32, %arg1: i32) -> (i32, i32, i32) {
    %c0_i32 = arith.constant 0 : i32
    %c0_i32_0 = arith.constant 0 : i32
    %c0_i32_1 = arith.constant 0 : i32
    return %arg0, %c0_i32, %c0_i32_0 : i32, i32, i32
  }
  func.func @transform_15(%arg0: i32, %arg1: i32) -> (i32, i32, i32) {
    %c0_i32 = arith.constant 0 : i32
    %c0_i32_0 = arith.constant 0 : i32
    %c0_i32_1 = arith.constant 0 : i32
    return %arg0, %c0_i32, %c0_i32_0 : i32, i32, i32
  }
  func.func @transform_16(%arg0: i32, %arg1: i32) -> (i32, i32, i32) {
    %c0_i32 = arith.constant 0 : i32
    %c0_i32_0 = arith.constant 0 : i32
    %c0_i32_1 = arith.constant 0 : i32
    return %arg0, %c0_i32, %c0_i32_0 : i32, i32, i32
  }
  func.func @transform_17(%arg0: i32, %arg1: i32) -> (i32, i32, i32, i32) {
    %c0_i32 = arith.constant 0 : i32
    %c0_i32_0 = arith.constant 0 : i32
    %c0_i32_1 = arith.constant 0 : i32
    return %arg0, %arg1, %c0_i32, %c0_i32_0 : i32, i32, i32, i32
  }
}

</mosaic_0001>

<llo_original>
// kernel: tpu_custom_call.1
$region0: #{tpu_custom_call.1}
  #allocation0 [shape = 'u32[]', space=smem, size = 0x4, offset = 0x4, fixed_abs, tag = 'smem constant byte address 0x4 - core index']
  #allocation1 [shape = 'u32[72,128]{1,0:T(1,128)}', space=vmem, size = 0x9000, scoped, tag = 'internal scratch']
  %s0 = inlined_call_operand.hbm [shape: f32[2,4,128], index: 0, kind: input, shape index: {}]
  %s1 = inlined_call_operand.hbm [shape: f32[2,1,128], index: 1, kind: input, shape index: {}]
  %s2 = inlined_call_operand.hbm [shape: bf16[128,128], index: 2, kind: input, shape index: {}]
  %s3 = inlined_call_operand.hbm [shape: f32[1,128], index: 3, kind: input, shape index: {}]
  %s4 = inlined_call_operand.hbm [shape: bf16[128,128], index: 4, kind: input, shape index: {}]
  %s5 = inlined_call_operand.hbm [shape: bf16[128,128], index: 5, kind: input, shape index: {}]
  %s6 = inlined_call_operand.hbm [shape: f32[1,128], index: 6, kind: input, shape index: {}]
  %s7 = inlined_call_operand.hbm [shape: f32[1,128], index: 7, kind: input, shape index: {}]
  %s8 = inlined_call_operand.hbm [shape: f32[1,128], index: 8, kind: input, shape index: {}]
  %s9 = inlined_call_operand.hbm [shape: bf16[2,128,128], index: 9, kind: input, shape index: {}]
  %s10 = inlined_call_operand.hbm [shape: bf16[2,256,128], index: 10, kind: input, shape index: {}]
  %s11 = inlined_call_operand.vmem [shape: f32[2,1,128], index: 11, kind: input, shape index: {}]
  %s12 = inlined_call_operand.hbm [shape: bf16[2,128,128], index: 12, kind: input, shape index: {}]
  %s13 = inlined_call_operand.hbm [shape: bf16[2,256,128], index: 13, kind: input, shape index: {}]
  %s14 = inlined_call_operand.vmem [shape: f32[2,1,128], index: 14, kind: input, shape index: {}]
  %s15 = inlined_call_operand.hbm [shape: bf16[2,128,256], index: 15, kind: input, shape index: {}]
  %s16 = inlined_call_operand.vmem [shape: f32[2,1,256], index: 16, kind: input, shape index: {}]
  %s17 = inlined_call_operand.hbm [shape: f32[2,2,16,256], index: 17, kind: output, shape index: {}]
  %s18 = sld [smem:[#allocation0]]
  $region157: #{tpu_custom_call.1} parent=0
    _
  %s20 = ssub.s32 1, %s18
  %s21 = scalar_select 0, %s20, %s18
  $region1: #{tpu_custom_call.1} parent=0
    #allocation2 [shape = 'u8[4096]{0}', space=vmem, size = 0x1000, scoped, tag = 'input window, operand 0']
    #allocation3 [shape = 's32[2]{0}', space=sflag, size = 0x8, scoped, tag = 'scoped memory for tpu_custom_call.1']
    #allocation4 [shape = 's32[2]{0}', space=sflag, size = 0x8, scoped, tag = 'scoped memory for tpu_custom_call.1']
    #allocation5 [shape = 'u8[1024]{0}', space=vmem, size = 0x400, scoped, tag = 'input window, operand 1']
    #allocation6 [shape = 's32[2]{0}', space=sflag, size = 0x8, scoped, tag = 'scoped memory for tpu_custom_call.1']
    #allocation7 [shape = 'u8[32768]{0}', space=vmem, size = 0x8000, scoped, tag = 'input window, operand 2, single buffered']
    #allocation8 [shape = 'u8[512]{0}', space=vmem, size = 0x400, scoped, tag = 'input window, operand 3, single buffered']
    #allocation9 [shape = 's32[1]{0}', space=sflag, size = 0x4, scoped, tag = 'scoped memory for tpu_custom_call.1']
    #allocation10 [shape = 'u8[32768]{0}', space=vmem, size = 0x8000, scoped, tag = 'input window, operand 4, single buffered']
    #allocation11 [shape = 'u8[32768]{0}', space=vmem, size = 0x8000, scoped, tag = 'input window, operand 5, single buffered']
    #allocation12 [shape = 's32[1]{0}', space=sflag, size = 0x4, scoped, tag = 'scoped memory for tpu_custom_call.1']
    #allocation13 [shape = 'u8[512]{0}', space=vmem, size = 0x400, scoped, tag = 'input window, operand 6, single buffered']
    #allocation14 [shape = 'u8[512]{0}', space=vmem, size = 0x400, scoped, tag = 'input window, operand 7, single buffered']
    #allocation15 [shape = 's32[1]{0}', space=sflag, size = 0x4, scoped, tag = 'scoped memory for tpu_custom_call.1']
    #allocation16 [shape = 'u8[512]{0}', space=vmem, size = 0x400, scoped, tag = 'input window, operand 8, single buffered']
    #allocation17 [shape = 'u8[65536]{0}', space=vmem, size = 0x10000, scoped, tag = 'input window, operand 9']
    #allocation18 [shape = 's32[2]{0}', space=sflag, size = 0x8, scoped, tag = 'scoped memory for tpu_custom_call.1']
    #allocation19 [shape = 'u8[131072]{0}', space=vmem, size = 0x20000, scoped, tag = 'input window, operand 10']
    #allocation20 [shape = 'u8[65536]{0}', space=vmem, size = 0x10000, scoped, tag = 'input window, operand 12']
    #allocation21 [shape = 's32[2]{0}', space=sflag, size = 0x8, scoped, tag = 'scoped memory for tpu_custom_call.1']
    #allocation22 [shape = 'u8[131072]{0}', space=vmem, size = 0x20000, scoped, tag = 'input window, operand 13']
    #allocation23 [shape = 'u8[131072]{0}', space=vmem, size = 0x20000, scoped, tag = 'input window, operand 15']
    #allocation24 [shape = 's32[2]{0}', space=sflag, size = 0x8, scoped, tag = 'scoped memory for tpu_custom_call.1']
    #allocation25 [shape = 'u8[32768]{0}', space=vmem, size = 0x8000, scoped, tag = 'output window, operand 0']
    %22 = vsyncpa [#allocation3], 0
    %s23 = scalar_lea.sflag [#allocation3], 1
    %24 = vsyncpa %s23, 0
    %25 = vsyncpa [#allocation6], 0
    %s26 = scalar_lea.sflag [#allocation6], 1
    %27 = vsyncpa %s26, 0
    %28 = vsyncpa [#allocation9], 0
    %29 = vsyncpa [#allocation12], 0
    %30 = vsyncpa [#allocation15], 0
    %31 = vsyncpa [#allocation18], 0
    %s32 = scalar_lea.sflag [#allocation18], 1
    %33 = vsyncpa %s32, 0
    %34 = vsyncpa [#allocation21], 0
    %s35 = scalar_lea.sflag [#allocation21], 1
    %36 = vsyncpa %s35, 0
    %37 = vsyncpa [#allocation24], 0
    %s38 = scalar_lea.sflag [#allocation24], 1
    %39 = vsyncpa %s38, 0
    %40 = vsyncpa [#allocation4], 0
    %s41 = scalar_lea.sflag [#allocation4], 1
    %42 = vsyncpa %s41, 0
    loop: start=0, step=1, limit=6
    $region2: #{tpu_custom_call.1} parent=1 // loop_pre_header
      _
    $region3: #{tpu_custom_call.1} parent=1 // loop_header
      %s44 = sphi 0, %s48
      %p45 = scmp.ge.s32.totalorder %s44, 6
      %s51 = sphi 0, %s63
      %s52 = sphi 0, %s59
      %s53 = sphi 0, %s51
      %s54 = sphi 0, %s52
      %s55 = sphi 0, %s53
      %s56 = sphi 0, %s54
      %s66 = sphi 0, %s68
      %s69 = sphi 0, %s66
      %s70 = sphi 0, %s69
      %s86 = sphi 0, %s70
      %s92 = sphi 0, %s94
      %s95 = sphi 0, %s92
      %s96 = sphi 0, %s95
      %s112 = sphi 0, %s96
      %s116 = sphi 0, %s116
      %s118 = sphi 0, %s116
      %s119 = sphi 0, %s118
      %s133 = sphi 0, %s119
      %s137 = sphi 0, %s137
      %s139 = sphi 0, %s137
      %s140 = sphi 0, %s139
      %s154 = sphi 0, %s140
      %s158 = sphi 0, %s158
      %s160 = sphi 0, %s158
      %s161 = sphi 0, %s160
      %s175 = sphi 0, %s161
      %s179 = sphi 0, %s179
      %s181 = sphi 0, %s179
      %s182 = sphi 0, %s181
      %s196 = sphi 0, %s182
      %s200 = sphi 0, %s200
      %s202 = sphi 0, %s200
      %s203 = sphi 0, %s202
      %s217 = sphi 0, %s203
      %s221 = sphi 0, %s221
      %s223 = sphi 0, %s221
      %s224 = sphi 0, %s223
      %s238 = sphi 0, %s224
      %s242 = sphi 0, %s242
      %s244 = sphi 0, %s242
      %s245 = sphi 0, %s244
      %s259 = sphi 0, %s245
      %s265 = sphi 0, %s267
      %s268 = sphi 0, %s265
      %s269 = sphi 0, %s268
      %s285 = sphi 0, %s269
      %s291 = sphi 0, %s293
      %s294 = sphi 0, %s291
      %s295 = sphi 0, %s294
      %s311 = sphi 0, %s295
      %s317 = sphi 0, %s319
      %s320 = sphi 0, %s317
      %s321 = sphi 0, %s320
      %s337 = sphi 0, %s321
      %s343 = sphi 0, %s345
      %s346 = sphi 0, %s343
      %s347 = sphi 0, %s346
      %s363 = sphi 0, %s347
      %s369 = sphi 0, %s371
      %s372 = sphi 0, %s369
      %s373 = sphi 0, %s372
      %s389 = sphi 0, %s373
      %s395 = sphi 0, %s397
      %s398 = sphi 0, %s395
      %s399 = sphi 0, %s398
      %s415 = sphi 0, %s399
      %s421 = sphi 0, %s423
      %s424 = sphi 0, %s421
      %s425 = sphi 0, %s424
      %s441 = sphi 0, %s425
      %s447 = sphi 0, %s449
      %s450 = sphi 0, %s447
      %s451 = sphi 0, %s450
      %s467 = sphi 0, %s451
      %s475 = sphi 0, %s477
      %s478 = sphi 0, %s475
      %s479 = sphi 0, %s478
      %s495 = sphi 0, %s479
    $region4: #{tpu_custom_call.1} parent=1 // loop_header_branch
      %47 = sbr.rel (%p45) target = $region8
    $region5: #{tpu_custom_call.1} parent=1 // loop_body
      %s49 = ssub.s32 %s44, 1
      %s50 = ssub.s32 %s44, 2
      %s57 = sadd.s32 1, %s52
      %p58 = scmp.ge.s32.totalorder %s57, 2
      %s59 = scalar_select %p58, 0, %s57
      %s60 = sadd.s32 1, %s51
      %s61 = scalar_select %p58, %s60, %s51
      %p62 = scmp.ge.s32.totalorder %s61, 2
      %s63 = scalar_select %p62, 0, %s61
      %s64 = ssub.s32 %s52, %s59
      %p65 = scmp.eq.s32.totalorder %s64, 0
      %s67 = sadd.s32 %s66, 1
      %s68 = scalar_select %p65, %s66, %s67
      %p71 = pneg %p65
      %p72 = scmp.eq.s32.totalorder %s44, 3
      %p73 = por %p71, %p72
      %p74 = scmp.ne.s32.totalorder %s66, %s69
      %p75 = scmp.eq.s32.totalorder %s44, 0
      %p76 = por %p74, %p75
      %p77 = scmp.ne.s32.totalorder %s66, %s69
      %p78 = scmp.eq.s32.totalorder %s49, 3
      %p79 = por %p77, %p78
      %p80 = scmp.ne.s32.totalorder %s69, %s70
      %p81 = scmp.eq.s32.totalorder %s49, 0
      %p82 = por %p80, %p81
      %p83 = scmp.ne.s32.totalorder %s69, %s70
      %p84 = scmp.eq.s32.totalorder %s50, 3
      %p85 = por %p83, %p84
      %p87 = scmp.ne.s32.totalorder %s70, %s86
      %p88 = scmp.eq.s32.totalorder %s50, 0
      %p89 = por %p87, %p88
      %s90 = ssub.s32 %s52, %s59
      %p91 = scmp.eq.s32.totalorder %s90, 0
      %s93 = sadd.s32 %s92, 1
      %s94 = scalar_select %p91, %s92, %s93
      %p97 = pneg %p91
      %p98 = scmp.eq.s32.totalorder %s44, 3
      %p99 = por %p97, %p98
      %p100 = scmp.ne.s32.totalorder %s92, %s95
      %p101 = scmp.eq.s32.totalorder %s44, 0
      %p102 = por %p100, %p101
      %p103 = scmp.ne.s32.totalorder %s92, %s95
      %p104 = scmp.eq.s32.totalorder %s49, 3
      %p105 = por %p103, %p104
      %p106 = scmp.ne.s32.totalorder %s95, %s96
      %p107 = scmp.eq.s32.totalorder %s49, 0
      %p108 = por %p106, %p107
      %p109 = scmp.ne.s32.totalorder %s95, %s96
      %p110 = scmp.eq.s32.totalorder %s50, 3
      %p111 = por %p109, %p110
      %p113 = scmp.ne.s32.totalorder %s96, %s112
      %p114 = scmp.eq.s32.totalorder %s50, 0
      %p115 = por %p113, %p114
      %s117 = sadd.s32 %s116, 1
      %p120 = scmp.eq.s32.totalorder %s44, 3
      %p121 = scmp.ne.s32.totalorder %s116, %s118
      %p122 = scmp.eq.s32.totalorder %s44, 0
      %p123 = por %p121, %p122
      %p124 = scmp.ne.s32.totalorder %s116, %s118
      %p125 = scmp.eq.s32.totalorder %s49, 3
      %p126 = por %p124, %p125
      %p127 = scmp.ne.s32.totalorder %s118, %s119
      %p128 = scmp.eq.s32.totalorder %s49, 0
      %p129 = por %p127, %p128
      %p130 = scmp.ne.s32.totalorder %s118, %s119
      %p131 = scmp.eq.s32.totalorder %s50, 3
      %p132 = por %p130, %p131
      %p134 = scmp.ne.s32.totalorder %s119, %s133
      %p135 = scmp.eq.s32.totalorder %s50, 0
      %p136 = por %p134, %p135
      %s138 = sadd.s32 %s137, 1
      %p141 = scmp.eq.s32.totalorder %s44, 3
      %p142 = scmp.ne.s32.totalorder %s137, %s139
      %p143 = scmp.eq.s32.totalorder %s44, 0
      %p144 = por %p142, %p143
      %p145 = scmp.ne.s32.totalorder %s137, %s139
      %p146 = scmp.eq.s32.totalorder %s49, 3
      %p147 = por %p145, %p146
      %p148 = scmp.ne.s32.totalorder %s139, %s140
      %p149 = scmp.eq.s32.totalorder %s49, 0
      %p150 = por %p148, %p149
      %p151 = scmp.ne.s32.totalorder %s139, %s140
      %p152 = scmp.eq.s32.totalorder %s50, 3
      %p153 = por %p151, %p152
      %p155 = scmp.ne.s32.totalorder %s140, %s154
      %p156 = scmp.eq.s32.totalorder %s50, 0
      %p157 = por %p155, %p156
      %s159 = sadd.s32 %s158, 1
      %p162 = scmp.eq.s32.totalorder %s44, 3
      %p163 = scmp.ne.s32.totalorder %s158, %s160
      %p164 = scmp.eq.s32.totalorder %s44, 0
      %p165 = por %p163, %p164
      %p166 = scmp.ne.s32.totalorder %s158, %s160
      %p167 = scmp.eq.s32.totalorder %s49, 3
      %p168 = por %p166, %p167
      %p169 = scmp.ne.s32.totalorder %s160, %s161
      %p170 = scmp.eq.s32.totalorder %s49, 0
      %p171 = por %p169, %p170
      %p172 = scmp.ne.s32.totalorder %s160, %s161
      %p173 = scmp.eq.s32.totalorder %s50, 3
      %p174 = por %p172, %p173
      %p176 = scmp.ne.s32.totalorder %s161, %s175
      %p177 = scmp.eq.s32.totalorder %s50, 0
      %p178 = por %p176, %p177
      %s180 = sadd.s32 %s179, 1
      %p183 = scmp.eq.s32.totalorder %s44, 3
      %p184 = scmp.ne.s32.totalorder %s179, %s181
      %p185 = scmp.eq.s32.totalorder %s44, 0
      %p186 = por %p184, %p185
      %p187 = scmp.ne.s32.totalorder %s179, %s181
      %p188 = scmp.eq.s32.totalorder %s49, 3
      %p189 = por %p187, %p188
      %p190 = scmp.ne.s32.totalorder %s181, %s182
      %p191 = scmp.eq.s32.totalorder %s49, 0
      %p192 = por %p190, %p191
      %p193 = scmp.ne.s32.totalorder %s181, %s182
      %p194 = scmp.eq.s32.totalorder %s50, 3
      %p195 = por %p193, %p194
      %p197 = scmp.ne.s32.totalorder %s182, %s196
      %p198 = scmp.eq.s32.totalorder %s50, 0
      %p199 = por %p197, %p198
      %s201 = sadd.s32 %s200, 1
      %p204 = scmp.eq.s32.totalorder %s44, 3
      %p205 = scmp.ne.s32.totalorder %s200, %s202
      %p206 = scmp.eq.s32.totalorder %s44, 0
      %p207 = por %p205, %p206
      %p208 = scmp.ne.s32.totalorder %s200, %s202
      %p209 = scmp.eq.s32.totalorder %s49, 3
      %p210 = por %p208, %p209
      %p211 = scmp.ne.s32.totalorder %s202, %s203
      %p212 = scmp.eq.s32.totalorder %s49, 0
      %p213 = por %p211, %p212
      %p214 = scmp.ne.s32.totalorder %s202, %s203
      %p215 = scmp.eq.s32.totalorder %s50, 3
      %p216 = por %p214, %p215
      %p218 = scmp.ne.s32.totalorder %s203, %s217
      %p219 = scmp.eq.s32.totalorder %s50, 0
      %p220 = por %p218, %p219
      %s222 = sadd.s32 %s221, 1
      %p225 = scmp.eq.s32.totalorder %s44, 3
      %p226 = scmp.ne.s32.totalorder %s221, %s223
      %p227 = scmp.eq.s32.totalorder %s44, 0
      %p228 = por %p226, %p227
      %p229 = scmp.ne.s32.totalorder %s221, %s223
      %p230 = scmp.eq.s32.totalorder %s49, 3
      %p231 = por %p229, %p230
      %p232 = scmp.ne.s32.totalorder %s223, %s224
      %p233 = scmp.eq.s32.totalorder %s49, 0
      %p234 = por %p232, %p233
      %p235 = scmp.ne.s32.totalorder %s223, %s224
      %p236 = scmp.eq.s32.totalorder %s50, 3
      %p237 = por %p235, %p236
      %p239 = scmp.ne.s32.totalorder %s224, %s238
      %p240 = scmp.eq.s32.totalorder %s50, 0
      %p241 = por %p239, %p240
      %s243 = sadd.s32 %s242, 1
      %p246 = scmp.eq.s32.totalorder %s44, 3
      %p247 = scmp.ne.s32.totalorder %s242, %s244
      %p248 = scmp.eq.s32.totalorder %s44, 0
      %p249 = por %p247, %p248
      %p250 = scmp.ne.s32.totalorder %s242, %s244
      %p251 = scmp.eq.s32.totalorder %s49, 3
      %p252 = por %p250, %p251
      %p253 = scmp.ne.s32.totalorder %s244, %s245
      %p254 = scmp.eq.s32.totalorder %s49, 0
      %p255 = por %p253, %p254
      %p256 = scmp.ne.s32.totalorder %s244, %s245
      %p257 = scmp.eq.s32.totalorder %s50, 3
      %p258 = por %p256, %p257
      %p260 = scmp.ne.s32.totalorder %s245, %s259
      %p261 = scmp.eq.s32.totalorder %s50, 0
      %p262 = por %p260, %p261
      %s263 = ssub.s32 %s51, %s63
      %p264 = scmp.eq.s32.totalorder %s263, 0
      %s266 = sadd.s32 %s265, 1
      %s267 = scalar_select %p264, %s265, %s266
      %p270 = pneg %p264
      %p271 = scmp.eq.s32.totalorder %s44, 3
      %p272 = por %p270, %p271
      %p273 = scmp.ne.s32.totalorder %s265, %s268
      %p274 = scmp.eq.s32.totalorder %s44, 0
      %p275 = por %p273, %p274
      %p276 = scmp.ne.s32.totalorder %s265, %s268
      %p277 = scmp.eq.s32.totalorder %s49, 3
      %p278 = por %p276, %p277
      %p279 = scmp.ne.s32.totalorder %s268, %s269
      %p280 = scmp.eq.s32.totalorder %s49, 0
      %p281 = por %p279, %p280
      %p282 = scmp.ne.s32.totalorder %s268, %s269
      %p283 = scmp.eq.s32.totalorder %s50, 3
      %p284 = por %p282, %p283
      %p286 = scmp.ne.s32.totalorder %s269, %s285
      %p287 = scmp.eq.s32.totalorder %s50, 0
      %p288 = por %p286, %p287
      %s289 = ssub.s32 %s51, %s63
      %p290 = scmp.eq.s32.totalorder %s289, 0
      %s292 = sadd.s32 %s291, 1
      %s293 = scalar_select %p290, %s291, %s292
      %p296 = pneg %p290
      %p297 = scmp.eq.s32.totalorder %s44, 3
      %p298 = por %p296, %p297
      %p299 = scmp.ne.s32.totalorder %s291, %s294
      %p300 = scmp.eq.s32.totalorder %s44, 0
      %p301 = por %p299, %p300
      %p302 = scmp.ne.s32.totalorder %s291, %s294
      %p303 = scmp.eq.s32.totalorder %s49, 3
      %p304 = por %p302, %p303
      %p305 = scmp.ne.s32.totalorder %s294, %s295
      %p306 = scmp.eq.s32.totalorder %s49, 0
      %p307 = por %p305, %p306
      %p308 = scmp.ne.s32.totalorder %s294, %s295
      %p309 = scmp.eq.s32.totalorder %s50, 3
      %p310 = por %p308, %p309
      %p312 = scmp.ne.s32.totalorder %s295, %s311
      %p313 = scmp.eq.s32.totalorder %s50, 0
      %p314 = por %p312, %p313
      %s315 = ssub.s32 %s51, %s63
      %p316 = scmp.eq.s32.totalorder %s315, 0
      %s318 = sadd.s32 %s317, 1
      %s319 = scalar_select %p316, %s317, %s318
      %p322 = pneg %p316
      %p323 = scmp.eq.s32.totalorder %s44, 3
      %p324 = por %p322, %p323
      %p325 = scmp.ne.s32.totalorder %s317, %s320
      %p326 = scmp.eq.s32.totalorder %s44, 0
      %p327 = por %p325, %p326
      %p328 = scmp.ne.s32.totalorder %s317, %s320
      %p329 = scmp.eq.s32.totalorder %s49, 3
      %p330 = por %p328, %p329
      %p331 = scmp.ne.s32.totalorder %s320, %s321
      %p332 = scmp.eq.s32.totalorder %s49, 0
      %p333 = por %p331, %p332
      %p334 = scmp.ne.s32.totalorder %s320, %s321
      %p335 = scmp.eq.s32.totalorder %s50, 3
      %p336 = por %p334, %p335
      %p338 = scmp.ne.s32.totalorder %s321, %s337
      %p339 = scmp.eq.s32.totalorder %s50, 0
      %p340 = por %p338, %p339
      %s341 = ssub.s32 %s51, %s63
      %p342 = scmp.eq.s32.totalorder %s341, 0
      %s344 = sadd.s32 %s343, 1
      %s345 = scalar_select %p342, %s343, %s344
      %p348 = pneg %p342
      %p349 = scmp.eq.s32.totalorder %s44, 3
      %p350 = por %p348, %p349
      %p351 = scmp.ne.s32.totalorder %s343, %s346
      %p352 = scmp.eq.s32.totalorder %s44, 0
      %p353 = por %p351, %p352
      %p354 = scmp.ne.s32.totalorder %s343, %s346
      %p355 = scmp.eq.s32.totalorder %s49, 3
      %p356 = por %p354, %p355
      %p357 = scmp.ne.s32.totalorder %s346, %s347
      %p358 = scmp.eq.s32.totalorder %s49, 0
      %p359 = por %p357, %p358
      %p360 = scmp.ne.s32.totalorder %s346, %s347
      %p361 = scmp.eq.s32.totalorder %s50, 3
      %p362 = por %p360, %p361
      %p364 = scmp.ne.s32.totalorder %s347, %s363
      %p365 = scmp.eq.s32.totalorder %s50, 0
      %p366 = por %p364, %p365
      %s367 = ssub.s32 %s51, %s63
      %p368 = scmp.eq.s32.totalorder %s367, 0
      %s370 = sadd.s32 %s369, 1
      %s371 = scalar_select %p368, %s369, %s370
      %p374 = pneg %p368
      %p375 = scmp.eq.s32.totalorder %s44, 3
      %p376 = por %p374, %p375
      %p377 = scmp.ne.s32.totalorder %s369, %s372
      %p378 = scmp.eq.s32.totalorder %s44, 0
      %p379 = por %p377, %p378
      %p380 = scmp.ne.s32.totalorder %s369, %s372
      %p381 = scmp.eq.s32.totalorder %s49, 3
      %p382 = por %p380, %p381
      %p383 = scmp.ne.s32.totalorder %s372, %s373
      %p384 = scmp.eq.s32.totalorder %s49, 0
      %p385 = por %p383, %p384
      %p386 = scmp.ne.s32.totalorder %s372, %s373
      %p387 = scmp.eq.s32.totalorder %s50, 3
      %p388 = por %p386, %p387
      %p390 = scmp.ne.s32.totalorder %s373, %s389
      %p391 = scmp.eq.s32.totalorder %s50, 0
      %p392 = por %p390, %p391
      %s393 = ssub.s32 %s51, %s63
      %p394 = scmp.eq.s32.totalorder %s393, 0
      %s396 = sadd.s32 %s395, 1
      %s397 = scalar_select %p394, %s395, %s396
      %p400 = pneg %p394
      %p401 = scmp.eq.s32.totalorder %s44, 3
      %p402 = por %p400, %p401
      %p403 = scmp.ne.s32.totalorder %s395, %s398
      %p404 = scmp.eq.s32.totalorder %s44, 0
      %p405 = por %p403, %p404
      %p406 = scmp.ne.s32.totalorder %s395, %s398
      %p407 = scmp.eq.s32.totalorder %s49, 3
      %p408 = por %p406, %p407
      %p409 = scmp.ne.s32.totalorder %s398, %s399
      %p410 = scmp.eq.s32.totalorder %s49, 0
      %p411 = por %p409, %p410
      %p412 = scmp.ne.s32.totalorder %s398, %s399
      %p413 = scmp.eq.s32.totalorder %s50, 3
      %p414 = por %p412, %p413
      %p416 = scmp.ne.s32.totalorder %s399, %s415
      %p417 = scmp.eq.s32.totalorder %s50, 0
      %p418 = por %p416, %p417
      %s419 = ssub.s32 %s51, %s63
      %p420 = scmp.eq.s32.totalorder %s419, 0
      %s422 = sadd.s32 %s421, 1
      %s423 = scalar_select %p420, %s421, %s422
      %p426 = pneg %p420
      %p427 = scmp.eq.s32.totalorder %s44, 3
      %p428 = por %p426, %p427
      %p429 = scmp.ne.s32.totalorder %s421, %s424
      %p430 = scmp.eq.s32.totalorder %s44, 0
      %p431 = por %p429, %p430
      %p432 = scmp.ne.s32.totalorder %s421, %s424
      %p433 = scmp.eq.s32.totalorder %s49, 3
      %p434 = por %p432, %p433
      %p435 = scmp.ne.s32.totalorder %s424, %s425
      %p436 = scmp.eq.s32.totalorder %s49, 0
      %p437 = por %p435, %p436
      %p438 = scmp.ne.s32.totalorder %s424, %s425
      %p439 = scmp.eq.s32.totalorder %s50, 3
      %p440 = por %p438, %p439
      %p442 = scmp.ne.s32.totalorder %s425, %s441
      %p443 = scmp.eq.s32.totalorder %s50, 0
      %p444 = por %p442, %p443
      %s445 = ssub.s32 %s51, %s63
      %p446 = scmp.eq.s32.totalorder %s445, 0
      %s448 = sadd.s32 %s447, 1
      %s449 = scalar_select %p446, %s447, %s448
      %p452 = pneg %p446
      %p453 = scmp.eq.s32.totalorder %s44, 3
      %p454 = por %p452, %p453
      %p455 = scmp.ne.s32.totalorder %s447, %s450
      %p456 = scmp.eq.s32.totalorder %s44, 0
      %p457 = por %p455, %p456
      %p458 = scmp.ne.s32.totalorder %s447, %s450
      %p459 = scmp.eq.s32.totalorder %s49, 3
      %p460 = por %p458, %p459
      %p461 = scmp.ne.s32.totalorder %s450, %s451
      %p462 = scmp.eq.s32.totalorder %s49, 0
      %p463 = por %p461, %p462
      %p464 = scmp.ne.s32.totalorder %s450, %s451
      %p465 = scmp.eq.s32.totalorder %s50, 3
      %p466 = por %p464, %p465
      %p468 = scmp.ne.s32.totalorder %s451, %s467
      %p469 = scmp.eq.s32.totalorder %s50, 0
      %p470 = por %p468, %p469
      %s471 = ssub.s32 %s51, %s63
      %s472 = ssub.s32 %s52, %s59
      %s473 = sor.u32 %s471, %s472
      %p474 = scmp.eq.s32.totalorder %s473, 0
      %s476 = sadd.s32 %s475, 1
      %s477 = scalar_select %p474, %s475, %s476
      %p480 = pneg %p474
      %p481 = scmp.eq.s32.totalorder %s44, 3
      %p482 = por %p480, %p481
      %p483 = scmp.ne.s32.totalorder %s475, %s478
      %p484 = scmp.eq.s32.totalorder %s44, 0
      %p485 = por %p483, %p484
      %p486 = scmp.ne.s32.totalorder %s475, %s478
      %p487 = scmp.eq.s32.totalorder %s49, 3
      %p488 = por %p486, %p487
      %p489 = scmp.ne.s32.totalorder %s478, %s479
      %p490 = scmp.eq.s32.totalorder %s49, 0
      %p491 = por %p489, %p490
      %p492 = scmp.ne.s32.totalorder %s478, %s479
      %p493 = scmp.eq.s32.totalorder %s50, 3
      %p494 = por %p492, %p493
      %p496 = scmp.ne.s32.totalorder %s479, %s495
      %p497 = scmp.eq.s32.totalorder %s50, 0
      %p498 = por %p496, %p497
      %p499 = scmp.le.s32.totalorder 1, %s44
      %p500 = scmp.lt.s32.totalorder %s44, 5
      %p501 = pnand %p499, %p500
      %p502 = pneg %p501
      // Predicated region
      $region9: #{tpu_custom_call.1} parent=5 // pred_check
        _
      $region10: #{tpu_custom_call.1} parent=5 // pred_check_branch
        %504 = sbr.rel (%p501) target = $region12
      $region11: #{tpu_custom_call.1} parent=5 // pred_region
        %s505 = ssub.s32 %s44, 1
        // Predicated region
        $region13: #{tpu_custom_call.1} parent=11 // pred_check
          %p506 = pneg %p129
        $region14: #{tpu_custom_call.1} parent=11 // pred_check_branch
          %508 = sbr.rel (%p506) target = $region16
        $region15: #{tpu_custom_call.1} parent=11 // pred_region
          %510 = vsyncadd [#allocation6], 0
          %s511 = sshll.u32 %s2, 4
          %s512 = int_to_ptr.hbm [resolvable:$true] %s511
          %s513 = sshll.u32 [#allocation7], 4
          %s514 = int_to_ptr.vmem [resolvable:$true] %s513
          %519 = dma.hbm_to_vmem [thread:$0]  %s512, 1024, %s514, [#allocation6], 64, 64, 4
        $region16: #{tpu_custom_call.1} parent=11 // pred_fallthru
          _
        // Predicated region
        $region17: #{tpu_custom_call.1} parent=11 // pred_check
          %p520 = pneg %p150
        $region18: #{tpu_custom_call.1} parent=11 // pred_check_branch
          %522 = sbr.rel (%p520) target = $region20
        $region19: #{tpu_custom_call.1} parent=11 // pred_region
          %524 = vsyncadd [#allocation9], 0
          %s526 = sshll.u32 %s3, 4
          %s527 = int_to_ptr.hbm [resolvable:$true] %s526
          %s528 = sshll.u32 [#allocation8], 4
          %s529 = int_to_ptr.vmem [resolvable:$true] %s528
          %531 = dma.hbm_to_vmem [thread:$0]  %s527, 16, %s529, [#allocation9]
        $region20: #{tpu_custom_call.1} parent=11 // pred_fallthru
          _
        // Predicated region
        $region21: #{tpu_custom_call.1} parent=11 // pred_check
          %p532 = pneg %p171
        $region22: #{tpu_custom_call.1} parent=11 // pred_check_branch
          %534 = sbr.rel (%p532) target = $region24
        $region23: #{tpu_custom_call.1} parent=11 // pred_region
          %536 = vsyncadd [#allocation9], 0
          %s537 = sshll.u32 %s4, 4
          %s538 = int_to_ptr.hbm [resolvable:$true] %s537
          %s539 = sshll.u32 [#allocation10], 4
          %s540 = int_to_ptr.vmem [resolvable:$true] %s539
          %545 = dma.hbm_to_vmem [thread:$0]  %s538, 1024, %s540, [#allocation9], 64, 64, 4
        $region24: #{tpu_custom_call.1} parent=11 // pred_fallthru
          _
        // Predicated region
        $region25: #{tpu_custom_call.1} parent=11 // pred_check
          %p546 = pneg %p192
        $region26: #{tpu_custom_call.1} parent=11 // pred_check_branch
          %548 = sbr.rel (%p546) target = $region28
        $region27: #{tpu_custom_call.1} parent=11 // pred_region
          %550 = vsyncadd [#allocation12], 0
          %s551 = sshll.u32 %s5, 4
          %s552 = int_to_ptr.hbm [resolvable:$true] %s551
          %s553 = sshll.u32 [#allocation11], 4
          %s554 = int_to_ptr.vmem [resolvable:$true] %s553
          %559 = dma.hbm_to_vmem [thread:$0]  %s552, 1024, %s554, [#allocation12], 64, 64, 4
        $region28: #{tpu_custom_call.1} parent=11 // pred_fallthru
          _
        // Predicated region
        $region29: #{tpu_custom_call.1} parent=11 // pred_check
          %p560 = pneg %p213
        $region30: #{tpu_custom_call.1} parent=11 // pred_check_branch
          %562 = sbr.rel (%p560) target = $region32
        $region31: #{tpu_custom_call.1} parent=11 // pred_region
          %564 = vsyncadd [#allocation12], 0
          %s566 = sshll.u32 %s6, 4
          %s567 = int_to_ptr.hbm [resolvable:$true] %s566
          %s568 = sshll.u32 [#allocation13], 4
          %s569 = int_to_ptr.vmem [resolvable:$true] %s568
          %571 = dma.hbm_to_vmem [thread:$0]  %s567, 16, %s569, [#allocation12]
        $region32: #{tpu_custom_call.1} parent=11 // pred_fallthru
          _
        // Predicated region
        $region33: #{tpu_custom_call.1} parent=11 // pred_check
          %p572 = pneg %p234
        $region34: #{tpu_custom_call.1} parent=11 // pred_check_branch
          %574 = sbr.rel (%p572) target = $region36
        $region35: #{tpu_custom_call.1} parent=11 // pred_region
          %576 = vsyncadd [#allocation15], 0
          %s578 = sshll.u32 %s7, 4
          %s579 = int_to_ptr.hbm [resolvable:$true] %s578
          %s580 = sshll.u32 [#allocation14], 4
          %s581 = int_to_ptr.vmem [resolvable:$true] %s580
          %583 = dma.hbm_to_vmem [thread:$0]  %s579, 16, %s581, [#allocation15]
        $region36: #{tpu_custom_call.1} parent=11 // pred_fallthru
          _
        // Predicated region
        $region37: #{tpu_custom_call.1} parent=11 // pred_check
          %p584 = pneg %p255
        $region38: #{tpu_custom_call.1} parent=11 // pred_check_branch
          %586 = sbr.rel (%p584) target = $region40
        $region39: #{tpu_custom_call.1} parent=11 // pred_region
          %588 = vsyncadd [#allocation15], 0
          %s590 = sshll.u32 %s8, 4
          %s591 = int_to_ptr.hbm [resolvable:$true] %s590
          %s592 = sshll.u32 [#allocation16], 4
          %s593 = int_to_ptr.vmem [resolvable:$true] %s592
          %595 = dma.hbm_to_vmem [thread:$0]  %s591, 16, %s593, [#allocation15]
        $region40: #{tpu_custom_call.1} parent=11 // pred_fallthru
          _
      $region12: #{tpu_custom_call.1} parent=5 // pred_fallthru
        _
      %p596 = scmp.lt.s32.totalorder %s44, 4
      // Predicated region
      $region41: #{tpu_custom_call.1} parent=5 // pred_check
        %p597 = pneg %p596
      $region42: #{tpu_custom_call.1} parent=5 // pred_check_branch
        %599 = sbr.rel (%p597) target = $region44
      $region43: #{tpu_custom_call.1} parent=5 // pred_region
        // Predicated region
        $region45: #{tpu_custom_call.1} parent=43 // pred_check
          %p600 = pneg %p76
        $region46: #{tpu_custom_call.1} parent=43 // pred_check_branch
          %602 = sbr.rel (%p600) target = $region48
        $region47: #{tpu_custom_call.1} parent=43 // pred_region
          %s603 = sand.u32 %s66, 1
          %s604 = scalar_lea.sflag [#allocation3], %s603
          %s605 = sand.u32 %s66, 1
          %s606 = smul.addr %s605, 4
          %s607 = scalar_lea.vmem [#allocation2], %s606
          %609 = vsyncadd %s604, 0
          %s610 = smul.addr %s52, 4
          %s611 = scalar_lea.hbm %s0, %s610
          %s613 = sshll.u32 %s611, 4
          %s614 = int_to_ptr.hbm [resolvable:$true] %s613
          %s615 = sshll.u32 %s607, 4
          %s616 = int_to_ptr.vmem [resolvable:$true] %s615
          %618 = dma.hbm_to_vmem [thread:$0]  %s614, 64, %s616, %s604
        $region48: #{tpu_custom_call.1} parent=43 // pred_fallthru
          _
        // Predicated region
        $region49: #{tpu_custom_call.1} parent=43 // pred_check
          %p619 = pneg %p102
        $region50: #{tpu_custom_call.1} parent=43 // pred_check_branch
          %621 = sbr.rel (%p619) target = $region52
        $region51: #{tpu_custom_call.1} parent=43 // pred_region
          %s622 = sand.u32 %s44, 1
          %s623 = scalar_lea.sflag [#allocation6], %s622
          %s624 = sand.u32 %s92, 1
          %s625 = scalar_lea.vmem [#allocation5], %s624
          %627 = vsyncadd %s623, 0
          %s628 = scalar_lea.hbm %s1, %s52
          %s630 = sshll.u32 %s628, 4
          %s631 = int_to_ptr.hbm [resolvable:$true] %s630
          %s632 = sshll.u32 %s625, 4
          %s633 = int_to_ptr.vmem [resolvable:$true] %s632
          %635 = dma.hbm_to_vmem [thread:$0]  %s631, 16, %s633, %s623
        $region52: #{tpu_custom_call.1} parent=43 // pred_fallthru
          _
        // Predicated region
        $region53: #{tpu_custom_call.1} parent=43 // pred_check
          %p636 = pneg %p275
        $region54: #{tpu_custom_call.1} parent=43 // pred_check_branch
          %638 = sbr.rel (%p636) target = $region56
        $region55: #{tpu_custom_call.1} parent=43 // pred_region
          %s639 = sand.u32 %s44, 1
          %s640 = scalar_lea.sflag [#allocation18], %s639
          %s641 = sand.u32 %s265, 1
          %s642 = smul.addr %s641, 64
          %s643 = scalar_lea.vmem [#allocation17], %s642
          %645 = vsyncadd %s640, 0
          %s646 = smul.addr %s51, 16
          %s647 = smul.addr %s646, 4
          %s648 = scalar_lea.hbm %s9, %s647
          %s649 = sshll.u32 %s648, 4
          %s650 = int_to_ptr.hbm [resolvable:$true] %s649
          %s651 = sshll.u32 %s643, 4
          %s652 = int_to_ptr.vmem [resolvable:$true] %s651
          %657 = dma.hbm_to_vmem [thread:$0]  %s650, 1024, %s652, %s640, 64, 64, 4
        $region56: #{tpu_custom_call.1} parent=43 // pred_fallthru
          _
        // Predicated region
        $region57: #{tpu_custom_call.1} parent=43 // pred_check
          %p658 = pneg %p301
        $region58: #{tpu_custom_call.1} parent=43 // pred_check_branch
          %660 = sbr.rel (%p658) target = $region60
        $region59: #{tpu_custom_call.1} parent=43 // pred_region
          %s661 = sand.u32 %s44, 1
          %s662 = scalar_lea.sflag [#allocation18], %s661
          %s663 = sand.u32 %s291, 1
          %s664 = smul.addr %s663, 128
          %s665 = scalar_lea.vmem [#allocation19], %s664
          %667 = vsyncadd %s662, 0
          %s668 = smul.addr %s51, 32
          %s669 = smul.addr %s668, 4
          %s670 = scalar_lea.hbm %s10, %s669
          %s671 = sshll.u32 %s670, 4
          %s672 = int_to_ptr.hbm [resolvable:$true] %s671
          %s673 = sshll.u32 %s665, 4
          %s674 = int_to_ptr.vmem [resolvable:$true] %s673
          %679 = dma.hbm_to_vmem [thread:$0]  %s672, 2048, %s674, %s662, 64, 64, 4
        $region60: #{tpu_custom_call.1} parent=43 // pred_fallthru
          _
        // Predicated region
        $region61: #{tpu_custom_call.1} parent=43 // pred_check
          %p680 = pneg %p327
        $region62: #{tpu_custom_call.1} parent=43 // pred_check_branch
          %682 = sbr.rel (%p680) target = $region64
        $region63: #{tpu_custom_call.1} parent=43 // pred_region
          %p683 = scmp.lt.s32.totalorder %s51, 1
          %s684 = scalar_select %p683, %s51, 1
          %s685 = scalar_lea.vmem %s11, %s684
        $region64: #{tpu_custom_call.1} parent=43 // pred_fallthru
          _
        // Predicated region
        $region65: #{tpu_custom_call.1} parent=43 // pred_check
          %p686 = pneg %p353
        $region66: #{tpu_custom_call.1} parent=43 // pred_check_branch
          %688 = sbr.rel (%p686) target = $region68
        $region67: #{tpu_custom_call.1} parent=43 // pred_region
          %s689 = sand.u32 %s44, 1
          %s690 = scalar_lea.sflag [#allocation21], %s689
          %s691 = sand.u32 %s343, 1
          %s692 = smul.addr %s691, 64
          %s693 = scalar_lea.vmem [#allocation20], %s692
          %695 = vsyncadd %s690, 0
          %s696 = smul.addr %s51, 16
          %s697 = smul.addr %s696, 4
          %s698 = scalar_lea.hbm %s12, %s697
          %s699 = sshll.u32 %s698, 4
          %s700 = int_to_ptr.hbm [resolvable:$true] %s699
          %s701 = sshll.u32 %s693, 4
          %s702 = int_to_ptr.vmem [resolvable:$true] %s701
          %707 = dma.hbm_to_vmem [thread:$0]  %s700, 1024, %s702, %s690, 64, 64, 4
        $region68: #{tpu_custom_call.1} parent=43 // pred_fallthru
          _
        // Predicated region
        $region69: #{tpu_custom_call.1} parent=43 // pred_check
          %p708 = pneg %p379
        $region70: #{tpu_custom_call.1} parent=43 // pred_check_branch
          %710 = sbr.rel (%p708) target = $region72
        $region71: #{tpu_custom_call.1} parent=43 // pred_region
          %s711 = sand.u32 %s44, 1
          %s712 = scalar_lea.sflag [#allocation21], %s711
          %s713 = sand.u32 %s369, 1
          %s714 = smul.addr %s713, 128
          %s715 = scalar_lea.vmem [#allocation22], %s714
          %717 = vsyncadd %s712, 0
          %s718 = smul.addr %s51, 32
          %s719 = smul.addr %s718, 4
          %s720 = scalar_lea.hbm %s13, %s719
          %s721 = sshll.u32 %s720, 4
          %s722 = int_to_ptr.hbm [resolvable:$true] %s721
          %s723 = sshll.u32 %s715, 4
          %s724 = int_to_ptr.vmem [resolvable:$true] %s723
          %729 = dma.hbm_to_vmem [thread:$0]  %s722, 2048, %s724, %s712, 64, 64, 4
        $region72: #{tpu_custom_call.1} parent=43 // pred_fallthru
          _
        // Predicated region
        $region73: #{tpu_custom_call.1} parent=43 // pred_check
          %p730 = pneg %p405
        $region74: #{tpu_custom_call.1} parent=43 // pred_check_branch
          %732 = sbr.rel (%p730) target = $region76
        $region75: #{tpu_custom_call.1} parent=43 // pred_region
          %p733 = scmp.lt.s32.totalorder %s51, 1
          %s734 = scalar_select %p733, %s51, 1
          %s735 = scalar_lea.vmem %s14, %s734
        $region76: #{tpu_custom_call.1} parent=43 // pred_fallthru
          _
        // Predicated region
        $region77: #{tpu_custom_call.1} parent=43 // pred_check
          %p736 = pneg %p431
        $region78: #{tpu_custom_call.1} parent=43 // pred_check_branch
          %738 = sbr.rel (%p736) target = $region80
        $region79: #{tpu_custom_call.1} parent=43 // pred_region
          %s739 = sand.u32 %s421, 1
          %s740 = scalar_lea.sflag [#allocation24], %s739
          %s741 = sand.u32 %s421, 1
          %s742 = smul.addr %s741, 128
          %s743 = scalar_lea.vmem [#allocation23], %s742
          %745 = vsyncadd %s740, 0
          %s746 = smul.addr %s51, 32
          %s747 = smul.addr %s746, 4
          %s748 = scalar_lea.hbm %s15, %s747
          %s749 = sshll.u32 %s748, 4
          %s750 = int_to_ptr.hbm [resolvable:$true] %s749
          %s751 = sshll.u32 %s743, 4
          %s752 = int_to_ptr.vmem [resolvable:$true] %s751
          %757 = dma.hbm_to_vmem [thread:$0]  %s750, 2048, %s752, %s740, 128, 128, 8
        $region80: #{tpu_custom_call.1} parent=43 // pred_fallthru
          _
        // Predicated region
        $region81: #{tpu_custom_call.1} parent=43 // pred_check
          %p758 = pneg %p457
        $region82: #{tpu_custom_call.1} parent=43 // pred_check_branch
          %760 = sbr.rel (%p758) target = $region84
        $region83: #{tpu_custom_call.1} parent=43 // pred_region
          %p761 = scmp.lt.s32.totalorder %s51, 1
          %s762 = scalar_select %p761, %s51, 1
          %s763 = smul.addr %s762, 2
          %s764 = scalar_lea.vmem %s16, %s763
        $region84: #{tpu_custom_call.1} parent=43 // pred_fallthru
          _
      $region44: #{tpu_custom_call.1} parent=5 // pred_fallthru
        _
      %p765 = scmp.le.s32.totalorder 1, %s44
      %p766 = scmp.lt.s32.totalorder %s44, 5
      %p767 = pnand %p765, %p766
      %p768 = pneg %p767
      // Predicated region
      $region85: #{tpu_custom_call.1} parent=5 // pred_check
        _
      $region86: #{tpu_custom_call.1} parent=5 // pred_check_branch
        %770 = sbr.rel (%p767) target = $region88
      $region87: #{tpu_custom_call.1} parent=5 // pred_region
        %s771 = ssub.s32 %s44, 1
        %s772 = sand.u32 %s69, 1
        %s773 = scalar_lea.sflag [#allocation3], %s772
        %s774 = sand.u32 %s69, 1
        %s775 = smul.addr %s774, 4
        %s776 = scalar_lea.vmem [#allocation2], %s775
        // Predicated region
        $region89: #{tpu_custom_call.1} parent=87 // pred_check
          %p777 = pneg %p82
        $region90: #{tpu_custom_call.1} parent=87 // pred_check_branch
          %779 = sbr.rel (%p777) target = $region92
        $region91: #{tpu_custom_call.1} parent=87 // pred_region
          %781 = dma.done %s773, 64
        $region92: #{tpu_custom_call.1} parent=87 // pred_fallthru
          _
        %s782 = sand.u32 %s49, 1
        %s783 = scalar_lea.sflag [#allocation6], %s782
        %s784 = sand.u32 %s95, 1
        %s785 = scalar_lea.vmem [#allocation5], %s784
        // Predicated region
        $region93: #{tpu_custom_call.1} parent=87 // pred_check
          %p786 = pneg %p108
        $region94: #{tpu_custom_call.1} parent=87 // pred_check_branch
          %788 = sbr.rel (%p786) target = $region96
        $region95: #{tpu_custom_call.1} parent=87 // pred_region
          %790 = dma.done %s783, 16
        $region96: #{tpu_custom_call.1} parent=87 // pred_fallthru
          _
        // Predicated region
        $region97: #{tpu_custom_call.1} parent=87 // pred_check
          %p791 = pneg %p129
        $region98: #{tpu_custom_call.1} parent=87 // pred_check_branch
          %793 = sbr.rel (%p791) target = $region100
        $region99: #{tpu_custom_call.1} parent=87 // pred_region
          %795 = dma.done [#allocation6], 1024
        $region100: #{tpu_custom_call.1} parent=87 // pred_fallthru
          _
        // Predicated region
        $region101: #{tpu_custom_call.1} parent=87 // pred_check
          %p796 = pneg %p150
        $region102: #{tpu_custom_call.1} parent=87 // pred_check_branch
          %798 = sbr.rel (%p796) target = $region104
        $region103: #{tpu_custom_call.1} parent=87 // pred_region
          %800 = dma.done [#allocation9], 16
        $region104: #{tpu_custom_call.1} parent=87 // pred_fallthru
          _
        // Predicated region
        $region105: #{tpu_custom_call.1} parent=87 // pred_check
          %p801 = pneg %p171
        $region106: #{tpu_custom_call.1} parent=87 // pred_check_branch
          %803 = sbr.rel (%p801) target = $region108
        $region107: #{tpu_custom_call.1} parent=87 // pred_region
          %805 = dma.done [#allocation9], 1024
        $region108: #{tpu_custom_call.1} parent=87 // pred_fallthru
          _
        // Predicated region
        $region109: #{tpu_custom_call.1} parent=87 // pred_check
          %p806 = pneg %p192
        $region110: #{tpu_custom_call.1} parent=87 // pred_check_branch
          %808 = sbr.rel (%p806) target = $region112
        $region111: #{tpu_custom_call.1} parent=87 // pred_region
          %810 = dma.done [#allocation12], 1024
        $region112: #{tpu_custom_call.1} parent=87 // pred_fallthru
          _
        // Predicated region
        $region113: #{tpu_custom_call.1} parent=87 // pred_check
          %p811 = pneg %p213
        $region114: #{tpu_custom_call.1} parent=87 // pred_check_branch
          %813 = sbr.rel (%p811) target = $region116
        $region115: #{tpu_custom_call.1} parent=87 // pred_region
          %815 = dma.done [#allocation12], 16
        $region116: #{tpu_custom_call.1} parent=87 // pred_fallthru
          _
        // Predicated region
        $region117: #{tpu_custom_call.1} parent=87 // pred_check
          %p816 = pneg %p234
        $region118: #{tpu_custom_call.1} parent=87 // pred_check_branch
          %818 = sbr.rel (%p816) target = $region120
        $region119: #{tpu_custom_call.1} parent=87 // pred_region
          %820 = dma.done [#allocation15], 16
        $region120: #{tpu_custom_call.1} parent=87 // pred_fallthru
          _
        // Predicated region
        $region121: #{tpu_custom_call.1} parent=87 // pred_check
          %p821 = pneg %p255
        $region122: #{tpu_custom_call.1} parent=87 // pred_check_branch
          %823 = sbr.rel (%p821) target = $region124
        $region123: #{tpu_custom_call.1} parent=87 // pred_region
          %825 = dma.done [#allocation15], 16
        $region124: #{tpu_custom_call.1} parent=87 // pred_fallthru
          _
        %s826 = sand.u32 %s49, 1
        %s827 = scalar_lea.sflag [#allocation18], %s826
        %s828 = sand.u32 %s268, 1
        %s829 = smul.addr %s828, 64
        %s830 = scalar_lea.vmem [#allocation17], %s829
        // Predicated region
        $region125: #{tpu_custom_call.1} parent=87 // pred_check
          %p831 = pneg %p281
        $region126: #{tpu_custom_call.1} parent=87 // pred_check_branch
          %833 = sbr.rel (%p831) target = $region128
        $region127: #{tpu_custom_call.1} parent=87 // pred_region
          %835 = dma.done %s827, 1024
        $region128: #{tpu_custom_call.1} parent=87 // pred_fallthru
          _
        %s836 = sand.u32 %s49, 1
        %s837 = scalar_lea.sflag [#allocation18], %s836
        %s838 = sand.u32 %s294, 1
        %s839 = smul.addr %s838, 128
        %s840 = scalar_lea.vmem [#allocation19], %s839
        // Predicated region
        $region129: #{tpu_custom_call.1} parent=87 // pred_check
          %p841 = pneg %p307
        $region130: #{tpu_custom_call.1} parent=87 // pred_check_branch
          %843 = sbr.rel (%p841) target = $region132
        $region131: #{tpu_custom_call.1} parent=87 // pred_region
          %845 = dma.done %s837, 2048
        $region132: #{tpu_custom_call.1} parent=87 // pred_fallthru
          _
        %s846 = sand.u32 %s49, 1
        %s847 = scalar_lea.sflag [#allocation21], %s846
        %s848 = sand.u32 %s346, 1
        %s849 = smul.addr %s848, 64
        %s850 = scalar_lea.vmem [#allocation20], %s849
        // Predicated region
        $region133: #{tpu_custom_call.1} parent=87 // pred_check
          %p851 = pneg %p359
        $region134: #{tpu_custom_call.1} parent=87 // pred_check_branch
          %853 = sbr.rel (%p851) target = $region136
        $region135: #{tpu_custom_call.1} parent=87 // pred_region
          %855 = dma.done %s847, 1024
        $region136: #{tpu_custom_call.1} parent=87 // pred_fallthru
          _
        %s856 = sand.u32 %s49, 1
        %s857 = scalar_lea.sflag [#allocation21], %s856
        %s858 = sand.u32 %s372, 1
        %s859 = smul.addr %s858, 128
        %s860 = scalar_lea.vmem [#allocation22], %s859
        // Predicated region
        $region137: #{tpu_custom_call.1} parent=87 // pred_check
          %p861 = pneg %p385
        $region138: #{tpu_custom_call.1} parent=87 // pred_check_branch
          %863 = sbr.rel (%p861) target = $region140
        $region139: #{tpu_custom_call.1} parent=87 // pred_region
          %865 = dma.done %s857, 2048
        $region140: #{tpu_custom_call.1} parent=87 // pred_fallthru
          _
        %s866 = sand.u32 %s424, 1
        %s867 = scalar_lea.sflag [#allocation24], %s866
        %s868 = sand.u32 %s424, 1
        %s869 = smul.addr %s868, 128
        %s870 = scalar_lea.vmem [#allocation23], %s869
        // Predicated region
        $region141: #{tpu_custom_call.1} parent=87 // pred_check
          %p871 = pneg %p437
        $region142: #{tpu_custom_call.1} parent=87 // pred_check_branch
          %873 = sbr.rel (%p871) target = $region144
        $region143: #{tpu_custom_call.1} parent=87 // pred_region
          %875 = dma.done %s867, 2048
        $region144: #{tpu_custom_call.1} parent=87 // pred_fallthru
          _
        %s876 = sand.u32 %s69, 1
        %s877 = scalar_lea.sflag [#allocation3], %s876
        %s878 = sand.u32 %s69, 1
        %s879 = smul.addr %s878, 4
        %s880 = scalar_lea.vmem [#allocation2], %s879
        %p881 = pneg %p82
        %p882 = pneg %p79
        %s883 = sand.u32 %s49, 1
        %s884 = scalar_lea.sflag [#allocation6], %s883
        %s885 = sand.u32 %s95, 1
        %s886 = scalar_lea.vmem [#allocation5], %s885
        %p887 = pneg %p108
        %p888 = pneg %p105
        %p889 = pneg %p129
        %p890 = pneg %p126
        %p891 = pneg %p150
        %p892 = pneg %p147
        %p893 = pneg %p171
        %p894 = pneg %p168
        %p895 = pneg %p192
        %p896 = pneg %p189
        %p897 = pneg %p213
        %p898 = pneg %p210
        %p899 = pneg %p234
        %p900 = pneg %p231
        %p901 = pneg %p255
        %p902 = pneg %p252
        %s903 = sand.u32 %s49, 1
        %s904 = scalar_lea.sflag [#allocation18], %s903
        %s905 = sand.u32 %s268, 1
        %s906 = smul.addr %s905, 64
        %s907 = scalar_lea.vmem [#allocation17], %s906
        %p908 = pneg %p281
        %p909 = pneg %p278
        %s910 = sand.u32 %s49, 1
        %s911 = scalar_lea.sflag [#allocation18], %s910
        %s912 = sand.u32 %s294, 1
        %s913 = smul.addr %s912, 128
        %s914 = scalar_lea.vmem [#allocation19], %s913
        %p915 = pneg %p307
        %p916 = pneg %p304
        %p917 = scmp.lt.s32.totalorder %s53, 1
        %s918 = scalar_select %p917, %s53, 1
        %s919 = scalar_lea.vmem %s11, %s918
        %p920 = pneg %p333
        %p921 = pneg %p330
        %s922 = sand.u32 %s49, 1
        %s923 = scalar_lea.sflag [#allocation21], %s922
        %s924 = sand.u32 %s346, 1
        %s925 = smul.addr %s924, 64
        %s926 = scalar_lea.vmem [#allocation20], %s925
        %p927 = pneg %p359
        %p928 = pneg %p356
        %s929 = sand.u32 %s49, 1
        %s930 = scalar_lea.sflag [#allocation21], %s929
        %s931 = sand.u32 %s372, 1
        %s932 = smul.addr %s931, 128
        %s933 = scalar_lea.vmem [#allocation22], %s932
        %p934 = pneg %p385
        %p935 = pneg %p382
        %p936 = scmp.lt.s32.totalorder %s53, 1
        %s937 = scalar_select %p936, %s53, 1
        %s938 = scalar_lea.vmem %s14, %s937
        %p939 = pneg %p411
        %p940 = pneg %p408
        %s941 = sand.u32 %s424, 1
        %s942 = scalar_lea.sflag [#allocation24], %s941
        %s943 = sand.u32 %s424, 1
        %s944 = smul.addr %s943, 128
        %s945 = scalar_lea.vmem [#allocation23], %s944
        %p946 = pneg %p437
        %p947 = pneg %p434
        %p948 = scmp.lt.s32.totalorder %s53, 1
        %s949 = scalar_select %p948, %s53, 1
        %s950 = smul.addr %s949, 2
        %s951 = scalar_lea.vmem %s16, %s950
        %p952 = pneg %p463
        %p953 = pneg %p460
        %p954 = pneg %p491
        %p955 = pneg %p488
        %s956 = sand.u32 %s478, 1
        %s957 = scalar_lea.sflag [#allocation4], %s956
        %s958 = sand.u32 %s478, 1
        %s959 = smul.addr %s958, 32
        %s960 = scalar_lea.vmem [#allocation25], %s959
        %p961 = scmp.lt.s32.totalorder %s53, 1
        %s962 = scalar_select %p961, %s53, 1
        %s963 = scalar_lea.vmem %s11, %s962
        %p964 = scmp.lt.s32.totalorder %s53, 1
        %s965 = scalar_select %p964, %s53, 1
        %s966 = scalar_lea.vmem %s14, %s965
        %p967 = scmp.lt.s32.totalorder %s53, 1
        %s968 = scalar_select %p967, %s53, 1
        %s969 = smul.addr %s968, 2
        %s970 = scalar_lea.vmem %s16, %s969
        %v972 = vld [vmem:[%s785] sm:$0x1]
        %v973 = vpack.c.bf16 %v972, %v972
        %v974 = vld [vmem:[#allocation7] sm:$0xf]
        %v975 = vld [vmem:[#allocation7 + $0x4] sm:$0xf]
        %v976 = vld [vmem:[#allocation7 + $0x8] sm:$0xf]
        %v977 = vld [vmem:[#allocation7 + $0xc] sm:$0xf]
        %v978 = vld [vmem:[#allocation7 + $0x10] sm:$0xf]
        %v979 = vld [vmem:[#allocation7 + $0x14] sm:$0xf]
        %v980 = vld [vmem:[#allocation7 + $0x18] sm:$0xf]
        %v981 = vld [vmem:[#allocation7 + $0x1c] sm:$0xf]
        %v982 = vld [vmem:[#allocation7 + $0x20] sm:$0xf]
        %v983 = vld [vmem:[#allocation7 + $0x24] sm:$0xf]
        %v984 = vld [vmem:[#allocation7 + $0x28] sm:$0xf]
        %v985 = vld [vmem:[#allocation7 + $0x2c] sm:$0xf]
        %v986 = vld [vmem:[#allocation7 + $0x30] sm:$0xf]
        %v987 = vld [vmem:[#allocation7 + $0x34] sm:$0xf]
        %v988 = vld [vmem:[#allocation7 + $0x38] sm:$0xf]
        %v989 = vld [vmem:[#allocation7 + $0x3c] sm:$0xf]
        %v990 = vld [vmem:[#allocation8] sm:$0x1]
        %v1007 = vunpack.c.l.b16 %v974
        %v1008 = vunpack.c.l.b16 %v975
        %v1009 = vunpack.c.l.b16 %v976
        %v1010 = vunpack.c.l.b16 %v977
        %v1011 = vunpack.c.l.b16 %v978
        %v1012 = vunpack.c.l.b16 %v979
        %v1013 = vunpack.c.l.b16 %v980
        %v1014 = vunpack.c.l.b16 %v981
        %v1015 = vunpack.c.l.b16 %v982
        %v1016 = vunpack.c.l.b16 %v983
        %v1017 = vunpack.c.l.b16 %v984
        %v1018 = vunpack.c.l.b16 %v985
        %v1019 = vunpack.c.l.b16 %v986
        %v1020 = vunpack.c.l.b16 %v987
        %v1021 = vunpack.c.l.b16 %v988
        %v1022 = vunpack.c.l.b16 %v989
        %v1023 = vpack.c.b16 %v1008, %v1007
        %v1024 = vpack.c.b16 %v1010, %v1009
        %v1025 = vpack.c.b16 %v1012, %v1011
        %v1026 = vpack.c.b16 %v1014, %v1013
        %v1027 = vpack.c.b16 %v1016, %v1015
        %v1028 = vpack.c.b16 %v1018, %v1017
        %v1029 = vpack.c.b16 %v1020, %v1019
        %v1030 = vpack.c.b16 %v1022, %v1021
        %1039 = vmatpush.bf16.msra.mxu0 %v1030
        %1040 = vmatpush.bf16.msra.mxu0 %v1029
        %1041 = vmatpush.bf16.msra.mxu0 %v1028
        %1042 = vmatpush.bf16.msra.mxu0 %v1027
        %1043 = vmatpush.bf16.msra.mxu0 %v1026
        %1044 = vmatpush.bf16.msra.mxu0 %v1025
        %1045 = vmatpush.bf16.msra.mxu0 %v1024
        %1046 = vmatpush.bf16.msra.mxu0 %v1023
        %1047 = vmatmul.bf16.gmra.mxu0 %v973
        %v1048 = vpop.f32.mrf.mxu0
        %v1049 = vadd.f32 %v990, %v1048
        %v1050 = vpop.f32.mrf.mxu0
        %1051 = vdwg.mxu0
        %v1052 = vpack.c.bf16 %v1049, %v1049
        %v1053 = vld [vmem:[#allocation11] sm:$0xf]
        %v1054 = vld [vmem:[#allocation11 + $0x4] sm:$0xf]
        %v1055 = vld [vmem:[#allocation11 + $0x8] sm:$0xf]
        %v1056 = vld [vmem:[#allocation11 + $0xc] sm:$0xf]
        %v1057 = vld [vmem:[#allocation11 + $0x10] sm:$0xf]
        %v1058 = vld [vmem:[#allocation11 + $0x14] sm:$0xf]
        %v1059 = vld [vmem:[#allocation11 + $0x18] sm:$0xf]
        %v1060 = vld [vmem:[#allocation11 + $0x1c] sm:$0xf]
        %v1061 = vld [vmem:[#allocation11 + $0x20] sm:$0xf]
        %v1062 = vld [vmem:[#allocation11 + $0x24] sm:$0xf]
        %v1063 = vld [vmem:[#allocation11 + $0x28] sm:$0xf]
        %v1064 = vld [vmem:[#allocation11 + $0x2c] sm:$0xf]
        %v1065 = vld [vmem:[#allocation11 + $0x30] sm:$0xf]
        %v1066 = vld [vmem:[#allocation11 + $0x34] sm:$0xf]
        %v1067 = vld [vmem:[#allocation11 + $0x38] sm:$0xf]
        %v1068 = vld [vmem:[#allocation11 + $0x3c] sm:$0xf]
        %v1085 = vunpack.c.l.b16 %v1053
        %v1086 = vunpack.c.l.b16 %v1054
        %v1087 = vunpack.c.l.b16 %v1055
        %v1088 = vunpack.c.l.b16 %v1056
        %v1089 = vunpack.c.l.b16 %v1057
        %v1090 = vunpack.c.l.b16 %v1058
        %v1091 = vunpack.c.l.b16 %v1059
        %v1092 = vunpack.c.l.b16 %v1060
        %v1093 = vunpack.c.l.b16 %v1061
        %v1094 = vunpack.c.l.b16 %v1062
        %v1095 = vunpack.c.l.b16 %v1063
        %v1096 = vunpack.c.l.b16 %v1064
        %v1097 = vunpack.c.l.b16 %v1065
        %v1098 = vunpack.c.l.b16 %v1066
        %v1099 = vunpack.c.l.b16 %v1067
        %v1100 = vunpack.c.l.b16 %v1068
        %v1101 = vpack.c.b16 %v1086, %v1085
        %v1102 = vpack.c.b16 %v1088, %v1087
        %v1103 = vpack.c.b16 %v1090, %v1089
        %v1104 = vpack.c.b16 %v1092, %v1091
        %v1105 = vpack.c.b16 %v1094, %v1093
        %v1106 = vpack.c.b16 %v1096, %v1095
        %v1107 = vpack.c.b16 %v1098, %v1097
        %v1108 = vpack.c.b16 %v1100, %v1099
        %1117 = vmatpush.bf16.msra.mxu0 %v1108
        %1118 = vmatpush.bf16.msra.mxu0 %v1107
        %1119 = vmatpush.bf16.msra.mxu0 %v1106
        %1120 = vmatpush.bf16.msra.mxu0 %v1105
        %1121 = vmatpush.bf16.msra.mxu0 %v1104
        %1122 = vmatpush.bf16.msra.mxu0 %v1103
        %1123 = vmatpush.bf16.msra.mxu0 %v1102
        %1124 = vmatpush.bf16.msra.mxu0 %v1101
        %1125 = vmatmul.bf16.gmra.mxu0 %v1052
        %v1126 = vpop.f32.mrf.mxu0
        %v1127 = vadd.f32 0.0, %v1126
        %v1128 = vpop.f32.mrf.mxu0
        %1129 = vdwg.mxu0
        %v1130 = vld [vmem:[%s776] sm:$0xf]
        %v1131 = vpack.c.bf16 %v1130, %v1130
        %v1132 = vld [vmem:[#allocation10] sm:$0xf]
        %v1133 = vld [vmem:[#allocation10 + $0x4] sm:$0xf]
        %v1134 = vld [vmem:[#allocation10 + $0x8] sm:$0xf]
        %v1135 = vld [vmem:[#allocation10 + $0xc] sm:$0xf]
        %v1136 = vld [vmem:[#allocation10 + $0x10] sm:$0xf]
        %v1137 = vld [vmem:[#allocation10 + $0x14] sm:$0xf]
        %v1138 = vld [vmem:[#allocation10 + $0x18] sm:$0xf]
        %v1139 = vld [vmem:[#allocation10 + $0x1c] sm:$0xf]
        %v1140 = vld [vmem:[#allocation10 + $0x20] sm:$0xf]
        %v1141 = vld [vmem:[#allocation10 + $0x24] sm:$0xf]
        %v1142 = vld [vmem:[#allocation10 + $0x28] sm:$0xf]
        %v1143 = vld [vmem:[#allocation10 + $0x2c] sm:$0xf]
        %v1144 = vld [vmem:[#allocation10 + $0x30] sm:$0xf]
        %v1145 = vld [vmem:[#allocation10 + $0x34] sm:$0xf]
        %v1146 = vld [vmem:[#allocation10 + $0x38] sm:$0xf]
        %v1147 = vld [vmem:[#allocation10 + $0x3c] sm:$0xf]
        %v1148 = vperm.slane %v1127, 0
        %v1165 = vunpack.c.l.b16 %v1132
        %v1166 = vunpack.c.l.b16 %v1133
        %v1167 = vunpack.c.l.b16 %v1134
        %v1168 = vunpack.c.l.b16 %v1135
        %v1169 = vunpack.c.l.b16 %v1136
        %v1170 = vunpack.c.l.b16 %v1137
        %v1171 = vunpack.c.l.b16 %v1138
        %v1172 = vunpack.c.l.b16 %v1139
        %v1173 = vunpack.c.l.b16 %v1140
        %v1174 = vunpack.c.l.b16 %v1141
        %v1175 = vunpack.c.l.b16 %v1142
        %v1176 = vunpack.c.l.b16 %v1143
        %v1177 = vunpack.c.l.b16 %v1144
        %v1178 = vunpack.c.l.b16 %v1145
        %v1179 = vunpack.c.l.b16 %v1146
        %v1180 = vunpack.c.l.b16 %v1147
        %v1181 = vpack.c.b16 %v1166, %v1165
        %v1182 = vpack.c.b16 %v1168, %v1167
        %v1183 = vpack.c.b16 %v1170, %v1169
        %v1184 = vpack.c.b16 %v1172, %v1171
        %v1185 = vpack.c.b16 %v1174, %v1173
        %v1186 = vpack.c.b16 %v1176, %v1175
        %v1187 = vpack.c.b16 %v1178, %v1177
        %v1188 = vpack.c.b16 %v1180, %v1179
        %1197 = vmatpush.bf16.msra.mxu0 %v1188
        %1198 = vmatpush.bf16.msra.mxu0 %v1187
        %1199 = vmatpush.bf16.msra.mxu0 %v1186
        %1200 = vmatpush.bf16.msra.mxu0 %v1185
        %1201 = vmatpush.bf16.msra.mxu0 %v1184
        %1202 = vmatpush.bf16.msra.mxu0 %v1183
        %1203 = vmatpush.bf16.msra.mxu0 %v1182
        %1204 = vmatpush.bf16.msra.mxu0 %v1181
        %1205 = vmatmul.bf16.gmra.mxu0 %v1131
        %v1206 = vpop.f32.mrf.mxu0
        %v1207 = vadd.f32 %v1148, %v1206
        %v1208 = vpop.f32.mrf.mxu0
        %1209 = vdwg.mxu0
        %v1210 = vld [vmem:[#allocation13] sm:$0x1]
        %v1212 = vperm.slane %v1210, 0
        %v1214 = vadd.f32 %v1207, %v1212
        %vm1215 = vcmask 1043456
        %v1216 = vsel %vm1215, %v1214, 0.0
        %1217 = vadd.xlane.f32.xlu0 %v1216
        %v1218 = vpop.xlane.xlu0 %1217
        %v1219 = vmul.f32 %v1218, 0.027777778
        %v1220 = vmul.f32 %v1214, %v1214
        %v1221 = vsel %vm1215, %v1220, 0.0
        %1222 = vadd.xlane.f32.xlu0 %v1221
        %v1223 = vpop.xlane.xlu0 %1222
        %v1224 = vmul.f32 %v1223, 0.027777778
        %v1225 = vmul.f32 %v1219, %v1219
        %v1226 = vsub.f32 %v1224, %v1225
        %v1227 = vsub.f32 %v1214, %v1219
        %v1228 = vadd.f32 %v1226, 1e-05
        %v1229 = vrsqrt.pop %v1228
        %v1230 = vmul.f32 %v1229, %v1228
        %v1231 = vmul.f32 %v1230, %v1229
        %v1232 = vmul.f32 0.5, %v1231
        %v1233 = vsub.f32 1.5, %v1232
        %v1234 = vmul.f32 %v1229, %v1233
        %vm1235 = vweird.f32 %v1228
        %vm1236 = vweird.f32 %v1229
        %vm1237 = vmor %vm1235, %vm1236
        %v1238 = vsel %vm1237, %v1229, %v1234
        %v1239 = vmul.f32 %v1227, %v1238
        %v1240 = vld [vmem:[#allocation14] sm:$0x1]
        %v1242 = vperm.slane %v1240, 0
        %v1244 = vmul.f32 %v1239, %v1242
        %v1245 = vld [vmem:[#allocation16] sm:$0x1]
        %v1247 = vperm.slane %v1245, 0
        %v1249 = vadd.f32 %v1244, %v1247
        %v1250 = vpack.c.bf16 %v1249, %v1249
        %v1251 = vld [vmem:[%s963] sm:$0x1]
        %v1252 = vld [vmem:[%s830] sm:$0xf]
        %v1253 = vld [vmem:[%s830 + $0x4] sm:$0xf]
        %v1254 = vld [vmem:[%s830 + $0x8] sm:$0xf]
        %v1255 = vld [vmem:[%s830 + $0xc] sm:$0xf]
        %v1256 = vld [vmem:[%s830 + $0x10] sm:$0xf]
        %v1257 = vld [vmem:[%s830 + $0x14] sm:$0xf]
        %v1258 = vld [vmem:[%s830 + $0x18] sm:$0xf]
        %v1259 = vld [vmem:[%s830 + $0x1c] sm:$0xf]
        %v1260 = vld [vmem:[%s830 + $0x20] sm:$0xf]
        %v1261 = vld [vmem:[%s830 + $0x24] sm:$0xf]
        %v1262 = vld [vmem:[%s830 + $0x28] sm:$0xf]
        %v1263 = vld [vmem:[%s830 + $0x2c] sm:$0xf]
        %v1264 = vld [vmem:[%s830 + $0x30] sm:$0xf]
        %v1265 = vld [vmem:[%s830 + $0x34] sm:$0xf]
        %v1266 = vld [vmem:[%s830 + $0x38] sm:$0xf]
        %v1267 = vld [vmem:[%s830 + $0x3c] sm:$0xf]
        %v1269 = vperm.slane %v1251, 0
        %v1287 = vunpack.c.l.b16 %v1252
        %v1288 = vunpack.c.l.b16 %v1253
        %v1289 = vunpack.c.l.b16 %v1254
        %v1290 = vunpack.c.l.b16 %v1255
        %v1291 = vunpack.c.l.b16 %v1256
        %v1292 = vunpack.c.l.b16 %v1257
        %v1293 = vunpack.c.l.b16 %v1258
        %v1294 = vunpack.c.l.b16 %v1259
        %v1295 = vunpack.c.l.b16 %v1260
        %v1296 = vunpack.c.l.b16 %v1261
        %v1297 = vunpack.c.l.b16 %v1262
        %v1298 = vunpack.c.l.b16 %v1263
        %v1299 = vunpack.c.l.b16 %v1264
        %v1300 = vunpack.c.l.b16 %v1265
        %v1301 = vunpack.c.l.b16 %v1266
        %v1302 = vunpack.c.l.b16 %v1267
        %v1303 = vpack.c.b16 %v1288, %v1287
        %v1304 = vpack.c.b16 %v1290, %v1289
        %v1305 = vpack.c.b16 %v1292, %v1291
        %v1306 = vpack.c.b16 %v1294, %v1293
        %v1307 = vpack.c.b16 %v1296, %v1295
        %v1308 = vpack.c.b16 %v1298, %v1297
        %v1309 = vpack.c.b16 %v1300, %v1299
        %v1310 = vpack.c.b16 %v1302, %v1301
        %1319 = vmatpush.bf16.msra.mxu0 %v1310
        %1320 = vmatpush.bf16.msra.mxu0 %v1309
        %1321 = vmatpush.bf16.msra.mxu0 %v1308
        %1322 = vmatpush.bf16.msra.mxu0 %v1307
        %1323 = vmatpush.bf16.msra.mxu0 %v1306
        %1324 = vmatpush.bf16.msra.mxu0 %v1305
        %1325 = vmatpush.bf16.msra.mxu0 %v1304
        %1326 = vmatpush.bf16.msra.mxu0 %v1303
        %1327 = vmatmul.bf16.gmra.mxu0 %v1250
        %v1328 = vpop.f32.mrf.mxu0
        %v1329 = vadd.f32 %v1269, %v1328
        %v1330 = vpop.f32.mrf.mxu0
        %1331 = vdwg.mxu0
        %v1332 = vmul.f32 %v1329, %v1329
        %v1333 = vmul.f32 %v1329, %v1332
        %v1334 = vmul.f32 %v1333, 0.044715
        %v1335 = vadd.f32 %v1329, %v1334
        %v1336 = vmul.f32 %v1335, 0.7978846
        %v1337 = vtanh.pop %v1336
        %v1338 = vadd.f32 %v1337, 1.0
        %v1339 = vmul.f32 %v1338, 0.5
        %v1340 = vmul.f32 %v1329, %v1339
        %v1341 = vpack.c.bf16 %v1340, %v1340
        %v1343 = vunpack.c.l.b16 %v1250
        %v1344 = vpack.c.b16 %v1343, %v1343
        %v1346 = vshrl.u32 %v1344, 16
        %v1348 = vshll.u32 %v1344, 16
        %v1350 = vrot.slane %v1348, 1
        %v1351 = vor.u32 %v1346, %v1350
        %vm1353 = vcmask 1041408
        %vm1354 = vsmask.f32 1280
        %vm1355 = vmand %vm1353, %vm1354
        %v1356 = vsel %vm1355, %v1351, 0
        %v1357 = vld [vmem:[%s840] sm:$0xf]
        %v1358 = vld [vmem:[%s840 + $0x4] sm:$0xf]
        %v1359 = vld [vmem:[%s840 + $0x8] sm:$0xf]
        %v1360 = vld [vmem:[%s840 + $0xc] sm:$0xf]
        %v1361 = vld [vmem:[%s840 + $0x10] sm:$0xf]
        %v1362 = vld [vmem:[%s840 + $0x14] sm:$0xf]
        %v1363 = vld [vmem:[%s840 + $0x18] sm:$0xf]
        %v1364 = vld [vmem:[%s840 + $0x1c] sm:$0xf]
        %v1365 = vld [vmem:[%s840 + $0x20] sm:$0xf]
        %v1366 = vld [vmem:[%s840 + $0x24] sm:$0xf]
        %v1367 = vld [vmem:[%s840 + $0x28] sm:$0xf]
        %v1368 = vld [vmem:[%s840 + $0x2c] sm:$0xf]
        %v1369 = vld [vmem:[%s840 + $0x30] sm:$0xf]
        %v1370 = vld [vmem:[%s840 + $0x34] sm:$0xf]
        %v1371 = vld [vmem:[%s840 + $0x38] sm:$0xf]
        %v1372 = vld [vmem:[%s840 + $0x3c] sm:$0xf]
        %v1373 = vld [vmem:[%s840 + $0x40] sm:$0xf]
        %v1374 = vld [vmem:[%s840 + $0x44] sm:$0xf]
        %v1375 = vld [vmem:[%s840 + $0x48] sm:$0xf]
        %v1376 = vld [vmem:[%s840 + $0x4c] sm:$0xf]
        %v1377 = vld [vmem:[%s840 + $0x50] sm:$0xf]
        %v1378 = vld [vmem:[%s840 + $0x54] sm:$0xf]
        %v1379 = vld [vmem:[%s840 + $0x58] sm:$0xf]
        %v1380 = vld [vmem:[%s840 + $0x5c] sm:$0xf]
        %v1381 = vld [vmem:[%s840 + $0x60] sm:$0xf]
        %v1382 = vld [vmem:[%s840 + $0x64] sm:$0xf]
        %v1383 = vld [vmem:[%s840 + $0x68] sm:$0xf]
        %v1384 = vld [vmem:[%s840 + $0x6c] sm:$0xf]
        %v1385 = vld [vmem:[%s840 + $0x70] sm:$0xf]
        %v1386 = vld [vmem:[%s840 + $0x74] sm:$0xf]
        %v1387 = vld [vmem:[%s840 + $0x78] sm:$0xf]
        %v1388 = vld [vmem:[%s840 + $0x7c] sm:$0xf]
        %v1421 = vunpack.c.l.b16 %v1357
        %v1422 = vunpack.c.l.b16 %v1358
        %v1423 = vunpack.c.l.b16 %v1359
        %v1424 = vunpack.c.l.b16 %v1360
        %v1425 = vunpack.c.l.b16 %v1361
        %v1426 = vunpack.c.l.b16 %v1362
        %v1427 = vunpack.c.l.b16 %v1363
        %v1428 = vunpack.c.l.b16 %v1364
        %v1429 = vunpack.c.l.b16 %v1365
        %v1430 = vunpack.c.l.b16 %v1366
        %v1431 = vunpack.c.l.b16 %v1367
        %v1432 = vunpack.c.l.b16 %v1368
        %v1433 = vunpack.c.l.b16 %v1369
        %v1434 = vunpack.c.l.b16 %v1370
        %v1435 = vunpack.c.l.b16 %v1371
        %v1436 = vunpack.c.l.b16 %v1372
        %v1437 = vunpack.c.l.b16 %v1373
        %v1438 = vunpack.c.l.b16 %v1374
        %v1439 = vunpack.c.l.b16 %v1375
        %v1440 = vunpack.c.l.b16 %v1376
        %v1441 = vunpack.c.l.b16 %v1377
        %v1442 = vunpack.c.l.b16 %v1378
        %v1443 = vunpack.c.l.b16 %v1379
        %v1444 = vunpack.c.l.b16 %v1380
        %v1445 = vunpack.c.l.b16 %v1381
        %v1446 = vunpack.c.l.b16 %v1382
        %v1447 = vunpack.c.l.b16 %v1383
        %v1448 = vunpack.c.l.b16 %v1384
        %v1449 = vunpack.c.l.b16 %v1385
        %v1450 = vunpack.c.l.b16 %v1386
        %v1451 = vunpack.c.l.b16 %v1387
        %v1452 = vunpack.c.l.b16 %v1388
        %v1453 = vpack.c.b16 %v1422, %v1421
        %v1454 = vpack.c.b16 %v1424, %v1423
        %v1455 = vpack.c.b16 %v1426, %v1425
        %v1456 = vpack.c.b16 %v1428, %v1427
        %v1457 = vpack.c.b16 %v1430, %v1429
        %v1458 = vpack.c.b16 %v1432, %v1431
        %v1459 = vpack.c.b16 %v1434, %v1433
        %v1460 = vpack.c.b16 %v1436, %v1435
        %v1461 = vpack.c.b16 %v1438, %v1437
        %v1462 = vpack.c.b16 %v1440, %v1439
        %v1463 = vpack.c.b16 %v1442, %v1441
        %v1464 = vpack.c.b16 %v1444, %v1443
        %v1465 = vpack.c.b16 %v1446, %v1445
        %v1466 = vpack.c.b16 %v1448, %v1447
        %v1467 = vpack.c.b16 %v1450, %v1449
        %v1468 = vpack.c.b16 %v1452, %v1451
        %1485 = vmatpush.bf16.msra.mxu0 %v1460
        %1486 = vmatpush.bf16.msra.mxu0 %v1459
        %1487 = vmatpush.bf16.msra.mxu0 %v1458
        %1488 = vmatpush.bf16.msra.mxu0 %v1457
        %1489 = vmatpush.bf16.msra.mxu0 %v1456
        %1490 = vmatpush.bf16.msra.mxu0 %v1455
        %1491 = vmatpush.bf16.msra.mxu0 %v1454
        %1492 = vmatpush.bf16.msra.mxu0 %v1453
        %1493 = vmatmul.bf16.gmra.mxu0 %v1356
        %v1494 = vpop.f32.mrf.mxu0
        %v1495 = vadd.f32 %v1269, %v1494
        %v1496 = vpop.f32.mrf.mxu0
        %1497 = vdwg.mxu0
        %1498 = vmatpush.bf16.msra.mxu0 %v1468
        %1499 = vmatpush.bf16.msra.mxu0 %v1467
        %1500 = vmatpush.bf16.msra.mxu0 %v1466
        %1501 = vmatpush.bf16.msra.mxu0 %v1465
        %1502 = vmatpush.bf16.msra.mxu0 %v1464
        %1503 = vmatpush.bf16.msra.mxu0 %v1463
        %1504 = vmatpush.bf16.msra.mxu0 %v1462
        %1505 = vmatpush.bf16.msra.mxu0 %v1461
        %1506 = vmatmul.bf16.gmra.mxu0 %v1250
        %v1507 = vpop.f32.mrf.mxu0
        %v1508 = vadd.f32 %v1495, %v1507
        %v1509 = vpop.f32.mrf.mxu0
        %1510 = vdwg.mxu0
        %v1511 = vmul.f32 %v1508, %v1508
        %v1512 = vmul.f32 %v1508, %v1511
        %v1513 = vmul.f32 %v1512, 0.044715
        %v1514 = vadd.f32 %v1508, %v1513
        %v1515 = vmul.f32 %v1514, 0.7978846
        %v1516 = vtanh.pop %v1515
        %v1517 = vadd.f32 %v1516, 1.0
        %v1518 = vmul.f32 %v1517, 0.5
        %v1519 = vmul.f32 %v1508, %v1518
        %v1520 = vpack.c.bf16 %v1519, %v1519
        %v1521 = vld [vmem:[%s966] sm:$0x1]
        %v1523 = vunpack.c.l.b16 %v1520
        %v1524 = vpack.c.b16 %v1523, %v1523
        %v1525 = vrot.slane %v1524, 6
        %vm1526 = vcmask 1041408
        %v1529 = vsel %vm1526, %v1341, %v1525
        %v1531 = vld [vmem:[%s850] sm:$0xf]
        %v1532 = vld [vmem:[%s850 + $0x4] sm:$0xf]
        %v1533 = vld [vmem:[%s850 + $0x8] sm:$0xf]
        %v1534 = vld [vmem:[%s850 + $0xc] sm:$0xf]
        %v1535 = vld [vmem:[%s850 + $0x10] sm:$0xf]
        %v1536 = vld [vmem:[%s850 + $0x14] sm:$0xf]
        %v1537 = vld [vmem:[%s850 + $0x18] sm:$0xf]
        %v1538 = vld [vmem:[%s850 + $0x1c] sm:$0xf]
        %v1539 = vld [vmem:[%s850 + $0x20] sm:$0xf]
        %v1540 = vld [vmem:[%s850 + $0x24] sm:$0xf]
        %v1541 = vld [vmem:[%s850 + $0x28] sm:$0xf]
        %v1542 = vld [vmem:[%s850 + $0x2c] sm:$0xf]
        %v1543 = vld [vmem:[%s850 + $0x30] sm:$0xf]
        %v1544 = vld [vmem:[%s850 + $0x34] sm:$0xf]
        %v1545 = vld [vmem:[%s850 + $0x38] sm:$0xf]
        %v1546 = vld [vmem:[%s850 + $0x3c] sm:$0xf]
        %v1548 = vperm.slane %v1521, 0
        %v1566 = vunpack.c.l.b16 %v1531
        %v1567 = vunpack.c.l.b16 %v1532
        %v1568 = vunpack.c.l.b16 %v1533
        %v1569 = vunpack.c.l.b16 %v1534
        %v1570 = vunpack.c.l.b16 %v1535
        %v1571 = vunpack.c.l.b16 %v1536
        %v1572 = vunpack.c.l.b16 %v1537
        %v1573 = vunpack.c.l.b16 %v1538
        %v1574 = vunpack.c.l.b16 %v1539
        %v1575 = vunpack.c.l.b16 %v1540
        %v1576 = vunpack.c.l.b16 %v1541
        %v1577 = vunpack.c.l.b16 %v1542
        %v1578 = vunpack.c.l.b16 %v1543
        %v1579 = vunpack.c.l.b16 %v1544
        %v1580 = vunpack.c.l.b16 %v1545
        %v1581 = vunpack.c.l.b16 %v1546
        %v1582 = vpack.c.b16 %v1567, %v1566
        %v1583 = vpack.c.b16 %v1569, %v1568
        %v1584 = vpack.c.b16 %v1571, %v1570
        %v1585 = vpack.c.b16 %v1573, %v1572
        %v1586 = vpack.c.b16 %v1575, %v1574
        %v1587 = vpack.c.b16 %v1577, %v1576
        %v1588 = vpack.c.b16 %v1579, %v1578
        %v1589 = vpack.c.b16 %v1581, %v1580
        %1598 = vmatpush.bf16.msra.mxu0 %v1589
        %1599 = vmatpush.bf16.msra.mxu0 %v1588
        %1600 = vmatpush.bf16.msra.mxu0 %v1587
        %1601 = vmatpush.bf16.msra.mxu0 %v1586
        %1602 = vmatpush.bf16.msra.mxu0 %v1585
        %1603 = vmatpush.bf16.msra.mxu0 %v1584
        %1604 = vmatpush.bf16.msra.mxu0 %v1583
        %1605 = vmatpush.bf16.msra.mxu0 %v1582
        %1606 = vmatmul.bf16.gmra.mxu0 %v1529
        %v1607 = vpop.f32.mrf.mxu0
        %v1608 = vadd.f32 %v1548, %v1607
        %v1609 = vpop.f32.mrf.mxu0
        %1610 = vdwg.mxu0
        %v1611 = vmul.f32 %v1608, %v1608
        %v1612 = vmul.f32 %v1608, %v1611
        %v1613 = vmul.f32 %v1612, 0.044715
        %v1614 = vadd.f32 %v1608, %v1613
        %v1615 = vmul.f32 %v1614, 0.7978846
        %v1616 = vtanh.pop %v1615
        %v1617 = vadd.f32 %v1616, 1.0
        %v1618 = vmul.f32 %v1617, 0.5
        %v1619 = vmul.f32 %v1608, %v1618
        %v1620 = vpack.c.bf16 %v1619, %v1619
        %v1622 = vunpack.c.l.b16 %v1341
        %v1623 = vpack.c.b16 %v1622, %v1622
        %v1625 = vshrl.u32 %v1623, 16
        %v1627 = vshll.u32 %v1623, 16
        %v1629 = vrot.slane %v1627, 1
        %v1630 = vor.u32 %v1625, %v1629
        %v1632 = vsel %vm1355, %v1630, 0
        %v1634 = vrot.slane %v1632, 6
        %v1637 = vsel %vm1526, %v1520, %v1634
        %v1639 = vld [vmem:[%s860] sm:$0xf]
        %v1640 = vld [vmem:[%s860 + $0x4] sm:$0xf]
        %v1641 = vld [vmem:[%s860 + $0x8] sm:$0xf]
        %v1642 = vld [vmem:[%s860 + $0xc] sm:$0xf]
        %v1643 = vld [vmem:[%s860 + $0x10] sm:$0xf]
        %v1644 = vld [vmem:[%s860 + $0x14] sm:$0xf]
        %v1645 = vld [vmem:[%s860 + $0x18] sm:$0xf]
        %v1646 = vld [vmem:[%s860 + $0x1c] sm:$0xf]
        %v1647 = vld [vmem:[%s860 + $0x20] sm:$0xf]
        %v1648 = vld [vmem:[%s860 + $0x24] sm:$0xf]
        %v1649 = vld [vmem:[%s860 + $0x28] sm:$0xf]
        %v1650 = vld [vmem:[%s860 + $0x2c] sm:$0xf]
        %v1651 = vld [vmem:[%s860 + $0x30] sm:$0xf]
        %v1652 = vld [vmem:[%s860 + $0x34] sm:$0xf]
        %v1653 = vld [vmem:[%s860 + $0x38] sm:$0xf]
        %v1654 = vld [vmem:[%s860 + $0x3c] sm:$0xf]
        %v1655 = vld [vmem:[%s860 + $0x40] sm:$0xf]
        %v1656 = vld [vmem:[%s860 + $0x44] sm:$0xf]
        %v1657 = vld [vmem:[%s860 + $0x48] sm:$0xf]
        %v1658 = vld [vmem:[%s860 + $0x4c] sm:$0xf]
        %v1659 = vld [vmem:[%s860 + $0x50] sm:$0xf]
        %v1660 = vld [vmem:[%s860 + $0x54] sm:$0xf]
        %v1661 = vld [vmem:[%s860 + $0x58] sm:$0xf]
        %v1662 = vld [vmem:[%s860 + $0x5c] sm:$0xf]
        %v1663 = vld [vmem:[%s860 + $0x60] sm:$0xf]
        %v1664 = vld [vmem:[%s860 + $0x64] sm:$0xf]
        %v1665 = vld [vmem:[%s860 + $0x68] sm:$0xf]
        %v1666 = vld [vmem:[%s860 + $0x6c] sm:$0xf]
        %v1667 = vld [vmem:[%s860 + $0x70] sm:$0xf]
        %v1668 = vld [vmem:[%s860 + $0x74] sm:$0xf]
        %v1669 = vld [vmem:[%s860 + $0x78] sm:$0xf]
        %v1670 = vld [vmem:[%s860 + $0x7c] sm:$0xf]
        %v1703 = vunpack.c.l.b16 %v1639
        %v1704 = vunpack.c.l.b16 %v1640
        %v1705 = vunpack.c.l.b16 %v1641
        %v1706 = vunpack.c.l.b16 %v1642
        %v1707 = vunpack.c.l.b16 %v1643
        %v1708 = vunpack.c.l.b16 %v1644
        %v1709 = vunpack.c.l.b16 %v1645
        %v1710 = vunpack.c.l.b16 %v1646
        %v1711 = vunpack.c.l.b16 %v1647
        %v1712 = vunpack.c.l.b16 %v1648
        %v1713 = vunpack.c.l.b16 %v1649
        %v1714 = vunpack.c.l.b16 %v1650
        %v1715 = vunpack.c.l.b16 %v1651
        %v1716 = vunpack.c.l.b16 %v1652
        %v1717 = vunpack.c.l.b16 %v1653
        %v1718 = vunpack.c.l.b16 %v1654
        %v1719 = vunpack.c.l.b16 %v1655
        %v1720 = vunpack.c.l.b16 %v1656
        %v1721 = vunpack.c.l.b16 %v1657
        %v1722 = vunpack.c.l.b16 %v1658
        %v1723 = vunpack.c.l.b16 %v1659
        %v1724 = vunpack.c.l.b16 %v1660
        %v1725 = vunpack.c.l.b16 %v1661
        %v1726 = vunpack.c.l.b16 %v1662
        %v1727 = vunpack.c.l.b16 %v1663
        %v1728 = vunpack.c.l.b16 %v1664
        %v1729 = vunpack.c.l.b16 %v1665
        %v1730 = vunpack.c.l.b16 %v1666
        %v1731 = vunpack.c.l.b16 %v1667
        %v1732 = vunpack.c.l.b16 %v1668
        %v1733 = vunpack.c.l.b16 %v1669
        %v1734 = vunpack.c.l.b16 %v1670
        %v1735 = vpack.c.b16 %v1704, %v1703
        %v1736 = vpack.c.b16 %v1706, %v1705
        %v1737 = vpack.c.b16 %v1708, %v1707
        %v1738 = vpack.c.b16 %v1710, %v1709
        %v1739 = vpack.c.b16 %v1712, %v1711
        %v1740 = vpack.c.b16 %v1714, %v1713
        %v1741 = vpack.c.b16 %v1716, %v1715
        %v1742 = vpack.c.b16 %v1718, %v1717
        %v1743 = vpack.c.b16 %v1720, %v1719
        %v1744 = vpack.c.b16 %v1722, %v1721
        %v1745 = vpack.c.b16 %v1724, %v1723
        %v1746 = vpack.c.b16 %v1726, %v1725
        %v1747 = vpack.c.b16 %v1728, %v1727
        %v1748 = vpack.c.b16 %v1730, %v1729
        %v1749 = vpack.c.b16 %v1732, %v1731
        %v1750 = vpack.c.b16 %v1734, %v1733
        %1767 = vmatpush.bf16.msra.mxu0 %v1742
        %1768 = vmatpush.bf16.msra.mxu0 %v1741
        %1769 = vmatpush.bf16.msra.mxu0 %v1740
        %1770 = vmatpush.bf16.msra.mxu0 %v1739
        %1771 = vmatpush.bf16.msra.mxu0 %v1738
        %1772 = vmatpush.bf16.msra.mxu0 %v1737
        %1773 = vmatpush.bf16.msra.mxu0 %v1736
        %1774 = vmatpush.bf16.msra.mxu0 %v1735
        %1775 = vmatmul.bf16.gmra.mxu0 %v1637
        %v1776 = vpop.f32.mrf.mxu0
        %v1777 = vadd.f32 %v1548, %v1776
        %v1778 = vpop.f32.mrf.mxu0
        %1779 = vdwg.mxu0
        %1780 = vmatpush.bf16.msra.mxu0 %v1750
        %1781 = vmatpush.bf16.msra.mxu0 %v1749
        %1782 = vmatpush.bf16.msra.mxu0 %v1748
        %1783 = vmatpush.bf16.msra.mxu0 %v1747
        %1784 = vmatpush.bf16.msra.mxu0 %v1746
        %1785 = vmatpush.bf16.msra.mxu0 %v1745
        %1786 = vmatpush.bf16.msra.mxu0 %v1744
        %1787 = vmatpush.bf16.msra.mxu0 %v1743
        %1788 = vmatmul.bf16.gmra.mxu0 %v1529
        %v1789 = vpop.f32.mrf.mxu0
        %v1790 = vadd.f32 %v1777, %v1789
        %v1791 = vpop.f32.mrf.mxu0
        %1792 = vdwg.mxu0
        %v1793 = vmul.f32 %v1790, %v1790
        %v1794 = vmul.f32 %v1790, %v1793
        %v1795 = vmul.f32 %v1794, 0.044715
        %v1796 = vadd.f32 %v1790, %v1795
        %v1797 = vmul.f32 %v1796, 0.7978846
        %v1798 = vtanh.pop %v1797
        %v1799 = vadd.f32 %v1798, 1.0
        %v1800 = vmul.f32 %v1799, 0.5
        %v1801 = vmul.f32 %v1790, %v1800
        %v1802 = vpack.c.bf16 %v1801, %v1801
        %v1804 = vunpack.c.l.b16 %v1802
        %v1805 = vpack.c.b16 %v1804, %v1804
        %v1806 = vrot.slane %v1805, 6
        %v1808 = vunpack.c.l.b16 %v1620
        %v1809 = vpack.c.b16 %v1808, %v1808
        %v1810 = vrot.slane %v1809, 6
        %v1813 = vsel %vm1526, %v1620, %v1806
        %v1815 = vsel %vm1215, %v1813, %v1810
        %vm1816 = vcmask 1045504
        %v1818 = vsel %vm1816, %v1815, %v1805
        %v1820 = vld [vmem:[%s870] sm:$0xff]
        %v1821 = vld [vmem:[%s870 + $0x8] sm:$0xff]
        %v1822 = vld [vmem:[%s870 + $0x10] sm:$0xff]
        %v1823 = vld [vmem:[%s870 + $0x18] sm:$0xff]
        %v1824 = vld [vmem:[%s870 + $0x20] sm:$0xff]
        %v1825 = vld [vmem:[%s870 + $0x28] sm:$0xff]
        %v1826 = vld [vmem:[%s870 + $0x30] sm:$0xff]
        %v1827 = vld [vmem:[%s870 + $0x38] sm:$0xff]
        %v1828 = vld [vmem:[%s870 + $0x40] sm:$0xff]
        %v1829 = vld [vmem:[%s870 + $0x48] sm:$0xff]
        %v1830 = vld [vmem:[%s870 + $0x50] sm:$0xff]
        %v1831 = vld [vmem:[%s870 + $0x58] sm:$0xff]
        %v1832 = vld [vmem:[%s870 + $0x60] sm:$0xff]
        %v1833 = vld [vmem:[%s870 + $0x68] sm:$0xff]
        %v1834 = vld [vmem:[%s870 + $0x70] sm:$0xff]
        %v1835 = vld [vmem:[%s870 + $0x78] sm:$0xff]
        %v1836 = vld [vmem:[%s970] sm:$0x3]
        %v1838 = vperm.slane %v1836, 0
        %v1839 = vperm.slane %v1836, 1
        %v1858 = vunpack.c.l.b16 %v1820
        %v1859 = vunpack.c.h.b16 %v1820
        %v1860 = vunpack.c.l.b16 %v1821
        %v1861 = vunpack.c.h.b16 %v1821
        %v1862 = vunpack.c.l.b16 %v1822
        %v1863 = vunpack.c.h.b16 %v1822
        %v1864 = vunpack.c.l.b16 %v1823
        %v1865 = vunpack.c.h.b16 %v1823
        %v1866 = vunpack.c.l.b16 %v1824
        %v1867 = vunpack.c.h.b16 %v1824
        %v1868 = vunpack.c.l.b16 %v1825
        %v1869 = vunpack.c.h.b16 %v1825
        %v1870 = vunpack.c.l.b16 %v1826
        %v1871 = vunpack.c.h.b16 %v1826
        %v1872 = vunpack.c.l.b16 %v1827
        %v1873 = vunpack.c.h.b16 %v1827
        %v1874 = vunpack.c.l.b16 %v1828
        %v1875 = vunpack.c.h.b16 %v1828
        %v1876 = vunpack.c.l.b16 %v1829
        %v1877 = vunpack.c.h.b16 %v1829
        %v1878 = vunpack.c.l.b16 %v1830
        %v1879 = vunpack.c.h.b16 %v1830
        %v1880 = vunpack.c.l.b16 %v1831
        %v1881 = vunpack.c.h.b16 %v1831
        %v1882 = vunpack.c.l.b16 %v1832
        %v1883 = vunpack.c.h.b16 %v1832
        %v1884 = vunpack.c.l.b16 %v1833
        %v1885 = vunpack.c.h.b16 %v1833
        %v1886 = vunpack.c.l.b16 %v1834
        %v1887 = vunpack.c.h.b16 %v1834
        %v1888 = vunpack.c.l.b16 %v1835
        %v1889 = vunpack.c.h.b16 %v1835
        %v1890 = vpack.c.b16 %v1860, %v1858
        %v1891 = vpack.c.b16 %v1861, %v1859
        %v1892 = vpack.c.b16 %v1864, %v1862
        %v1893 = vpack.c.b16 %v1865, %v1863
        %v1894 = vpack.c.b16 %v1868, %v1866
        %v1895 = vpack.c.b16 %v1869, %v1867
        %v1896 = vpack.c.b16 %v1872, %v1870
        %v1897 = vpack.c.b16 %v1873, %v1871
        %v1898 = vpack.c.b16 %v1876, %v1874
        %v1899 = vpack.c.b16 %v1877, %v1875
        %v1900 = vpack.c.b16 %v1880, %v1878
        %v1901 = vpack.c.b16 %v1881, %v1879
        %v1902 = vpack.c.b16 %v1884, %v1882
        %v1903 = vpack.c.b16 %v1885, %v1883
        %v1904 = vpack.c.b16 %v1888, %v1886
        %v1905 = vpack.c.b16 %v1889, %v1887
        %1922 = vmatpush.bf16.msra.mxu0 %v1904
        %1923 = vmatpush.bf16.msra.mxu0 %v1902
        %1924 = vmatpush.bf16.msra.mxu0 %v1900
        %1925 = vmatpush.bf16.msra.mxu0 %v1898
        %1926 = vmatpush.bf16.msra.mxu0 %v1896
        %1927 = vmatpush.bf16.msra.mxu0 %v1894
        %1928 = vmatpush.bf16.msra.mxu0 %v1892
        %1929 = vmatpush.bf16.msra.mxu0 %v1890
        %1930 = vmatmul.bf16.gmra.mxu0 %v1818
        %v1931 = vpop.f32.mrf.mxu0
        %v1932 = vadd.f32 %v1838, %v1931
        %v1933 = vpop.f32.mrf.mxu0
        %v1934 = vadd.f32 %v1838, %v1933
        %1935 = vdwg.mxu0
        %1936 = vmatpush.bf16.msra.mxu0 %v1905
        %1937 = vmatpush.bf16.msra.mxu0 %v1903
        %1938 = vmatpush.bf16.msra.mxu0 %v1901
        %1939 = vmatpush.bf16.msra.mxu0 %v1899
        %1940 = vmatpush.bf16.msra.mxu0 %v1897
        %1941 = vmatpush.bf16.msra.mxu0 %v1895
        %1942 = vmatpush.bf16.msra.mxu0 %v1893
        %1943 = vmatpush.bf16.msra.mxu0 %v1891
        %1944 = vmatmul.bf16.gmra.mxu0 %v1818
        %v1945 = vpop.f32.mrf.mxu0
        %v1946 = vadd.f32 %v1839, %v1945
        %v1947 = vpop.f32.mrf.mxu0
        %v1948 = vadd.f32 %v1839, %v1947
        %1949 = vdwg.mxu0
        %p1950 = scmp.eq.s32.totalorder %s53, 0
        %v1951 = vxor.u32 %v1932, 2147483648
        %v1952 = vxor.u32 %v1934, 2147483648
        %v1953 = vmul.f32 %v1951, 1.442695
        %v1954 = vpow.pop %v1953
        %v1955 = vmul.f32 %v1952, 1.442695
        %v1956 = vpow.pop %v1955
        %v1957 = vadd.f32 %v1954, 1.0
        %v1958 = vadd.f32 %v1956, 1.0
        %v1959 = vrcp.pop %v1957
        %v1960 = vmul.f32 %v1957, %v1959
        %v1961 = vsub.f32 1.0, %v1960
        %v1962 = vmul.f32 %v1959, %v1961
        %v1963 = vadd.f32 %v1959, %v1962
        %vm1964 = vweird.f32 %v1957
        %vm1965 = vweird.f32 %v1959
        %vm1966 = vmor %vm1964, %vm1965
        %v1967 = vsel %vm1966, %v1959, %v1963
        %v1968 = vand.u32 2147483647, %v1957
        %vm1969 = vcmp.eq.f32.partialorder %v1968, 8.507059e+37
        %v1970 = vand.u32 %v1957, 2147483648
        %v1971 = vor.u32 1.1754944e-38, %v1970
        %v1972 = vsel %vm1969, %v1971, %v1967
        %v1973 = vmul.f32 1.0, %v1972
        %v1974 = vrcp.pop %v1958
        %v1975 = vmul.f32 %v1958, %v1974
        %v1976 = vsub.f32 1.0, %v1975
        %v1977 = vmul.f32 %v1974, %v1976
        %v1978 = vadd.f32 %v1974, %v1977
        %vm1979 = vweird.f32 %v1958
        %vm1980 = vweird.f32 %v1974
        %vm1981 = vmor %vm1979, %vm1980
        %v1982 = vsel %vm1981, %v1974, %v1978
        %v1983 = vand.u32 2147483647, %v1958
        %vm1984 = vcmp.eq.f32.partialorder %v1983, 8.507059e+37
        %v1985 = vand.u32 %v1958, 2147483648
        %v1986 = vor.u32 1.1754944e-38, %v1985
        %v1987 = vsel %vm1984, %v1986, %v1982
        %v1988 = vmul.f32 1.0, %v1987
        %s1989 = scalar_select %p1950, 1, 0
        %v1990 = vstv %s1989
        %vm1991 = vcmp.eq.s32.totalorder %v1990, 1
        %v1992 = vsel %vm1991, %v1973, %v1932
        %v1993 = vsel %vm1991, %v1988, %v1934
        %v1994 = vmax.f32 %v1946, 0.0
        %v1995 = vmax.f32 %v1948, 0.0
        %vm1996 = vcmp.ne.f32.partialorder %v1946, %v1946
        %vm1997 = vcmp.ne.f32.partialorder %v1948, %v1948
        %v1998 = vadd.f32 %v1946, 0.0
        %v1999 = vadd.f32 %v1948, 0.0
        %v2000 = vand.u32 2147483647, %v1946
        %v2001 = vand.u32 2147483647, %v1948
        %v2002 = vsub.f32 0.0, %v2000
        %v2003 = vsub.f32 0.0, %v2001
        %v2004 = vmul.f32 %v2002, 1.442695
        %v2005 = vpow.pop %v2004
        %v2006 = vmul.f32 %v2003, 1.442695
        %v2007 = vpow.pop %v2006
        %v2008 = vadd.f32 %v2005, 1.0
        %v2009 = vlog2.pop %v2008
        %v2010 = vmul.f32 %v2009, 0.6931472
        %v2011 = vmul.f32 -0.5, %v2005
        %v2012 = vadd.f32 %v2011, 1.0
        %v2013 = vmul.f32 %v2012, %v2005
        %v2014 = vand.u32 2147483647, %v2005
        %vm2015 = vcmp.lt.f32.partialorder %v2014, 0.0004427343
        %v2016 = vsel %vm2015, %v2013, %v2010
        %v2017 = vadd.f32 %v2007, 1.0
        %v2018 = vlog2.pop %v2017
        %v2019 = vmul.f32 %v2018, 0.6931472
        %v2020 = vmul.f32 -0.5, %v2007
        %v2021 = vadd.f32 %v2020, 1.0
        %v2022 = vmul.f32 %v2021, %v2007
        %v2023 = vand.u32 2147483647, %v2007
        %vm2024 = vcmp.lt.f32.partialorder %v2023, 0.0004427343
        %v2025 = vsel %vm2024, %v2022, %v2019
        %v2026 = vadd.f32 %v1994, %v2016
        %v2027 = vadd.f32 %v1995, %v2025
        %v2028 = vsel %vm1996, %v1998, %v2026
        %v2029 = vsel %vm1997, %v1999, %v2027
        %2030 = vst [vmem:[%s960] sm:$0xff] %v1992
        %2031 = vst [vmem:[%s960 + $0x8] sm:$0xff] %v2028
        %2032 = vst [vmem:[%s960 + $0x10] sm:$0xff] %v1993
        %2033 = vst [vmem:[%s960 + $0x18] sm:$0xff] %v2029
        %s2034 = sand.u32 %s478, 1
        %s2035 = scalar_lea.sflag [#allocation4], %s2034
        %s2036 = sand.u32 %s478, 1
        %s2037 = smul.addr %s2036, 32
        %s2038 = scalar_lea.vmem [#allocation25], %s2037
        // Predicated region
        $region145: #{tpu_custom_call.1} parent=87 // pred_check
          %p2039 = pneg %p488
        $region146: #{tpu_custom_call.1} parent=87 // pred_check_branch
          %2041 = sbr.rel (%p2039) target = $region148
        $region147: #{tpu_custom_call.1} parent=87 // pred_region
          %2043 = vsyncadd %s2035, 0
          %s2044 = smul.addr %s54, 4
          %s2045 = smul.addr %s53, 8
          %s2046 = sadd.s32 %s2044, %s2045
          %s2047 = smul.addr %s2046, 8
          %s2048 = scalar_lea.hbm %s17, %s2047
          %s2049 = sshll.u32 %s2038, 4
          %s2050 = int_to_ptr.vmem [resolvable:$true] %s2049
          %s2051 = sshll.u32 %s2048, 4
          %s2052 = int_to_ptr.hbm [resolvable:$true] %s2051
          %2057 = dma.vmem_to_hbm [thread:$0]  %s2050, 512, %s2052, %s2035, 256, 256, 16
        $region148: #{tpu_custom_call.1} parent=87 // pred_fallthru
          _
      $region88: #{tpu_custom_call.1} parent=5 // pred_fallthru
        _
      %p2058 = scmp.le.s32.totalorder 2, %s44
      // Predicated region
      $region149: #{tpu_custom_call.1} parent=5 // pred_check
        %p2059 = pneg %p2058
      $region150: #{tpu_custom_call.1} parent=5 // pred_check_branch
        %2061 = sbr.rel (%p2059) target = $region152
      $region151: #{tpu_custom_call.1} parent=5 // pred_region
        %s2062 = ssub.s32 %s44, 2
        // Predicated region
        $region153: #{tpu_custom_call.1} parent=151 // pred_check
          %p2063 = pneg %p494
        $region154: #{tpu_custom_call.1} parent=151 // pred_check_branch
          %2065 = sbr.rel (%p2063) target = $region156
        $region155: #{tpu_custom_call.1} parent=151 // pred_region
          %s2066 = sand.u32 %s479, 1
          %s2067 = scalar_lea.sflag [#allocation4], %s2066
          %s2068 = sand.u32 %s479, 1
          %s2069 = smul.addr %s2068, 32
          %s2070 = scalar_lea.vmem [#allocation25], %s2069
          %2072 = dma.done %s2067, 512
        $region156: #{tpu_custom_call.1} parent=151 // pred_fallthru
          _
      $region152: #{tpu_custom_call.1} parent=5 // pred_fallthru
        _
    $region6: #{tpu_custom_call.1} parent=1 // loop_footer
      %s48 = sadd.s32 1, %s44
    $region7: #{tpu_custom_call.1} parent=1 // loop_footer_branch
      %43 = sbr.rel target = $region3
    $region8: #{tpu_custom_call.1} parent=1 // loop_exit
      _
    %2073 = vsyncpa [#allocation3], 1
    %s2074 = scalar_lea.sflag [#allocation3], 1
    %2075 = vsyncpa %s2074, 1
    %2076 = vsyncpa [#allocation6], 1
    %s2077 = scalar_lea.sflag [#allocation6], 1
    %2078 = vsyncpa %s2077, 1
    %2079 = vsyncpa [#allocation9], 1
    %2080 = vsyncpa [#allocation12], 1
    %2081 = vsyncpa [#allocation15], 1
    %2082 = vsyncpa [#allocation18], 1
    %s2083 = scalar_lea.sflag [#allocation18], 1
    %2084 = vsyncpa %s2083, 1
    %2085 = vsyncpa [#allocation21], 1
    %s2086 = scalar_lea.sflag [#allocation21], 1
    %2087 = vsyncpa %s2086, 1
    %2088 = vsyncpa [#allocation24], 1
    %s2089 = scalar_lea.sflag [#allocation24], 1
    %2090 = vsyncpa %s2089, 1
    %2091 = vsyncpa [#allocation4], 1
    %s2092 = scalar_lea.sflag [#allocation4], 1
    %2093 = vsyncpa %s2092, 1

</llo_original>
